<compile_context>
chip_gen: v7x
topology: tpu7x:2x2x1
jax: 0.10.0
libtpu: 0.0.40
codegen_flags: <defaults>
</compile_context>

<pallas_src>
import math
import numpy as np

import jax
import jax.numpy as jnp
from jax import lax
from jax.experimental import pallas as pl
from jax.experimental.pallas import tpu as pltpu

N_WIRES = 4
N_LAYERS = 2
PI = math.pi
IMG = 28
IMG_FLAT = IMG * IMG  # 784


# ---------------------------------------------------------------------------
# Circuit description (mirrors the PyTorch `design` argument + TQLayer init)
# ---------------------------------------------------------------------------
def make_design():
    design = {"n_layers": N_LAYERS, "change_qubit": None}
    enta_wires = {
        0: [[0, 1], [1, 2], [2, 3], [3, 0]],
        1: [[0, 2], [1, 3], [2, 0], [3, 3]],   # [3, 3] -> entangler skipped
    }
    for layer in range(N_LAYERS):
        for q in range(N_WIRES):
            design[f"rot{layer}{q}"] = "U3"
            design[f"enta{layer}{q}"] = ("CU3", enta_wires[layer][q])
    return design


# torchquantum GeneralEncoder func_list: 16 input-driven rotations on 4 wires
ENC_LIST = (
    [("ry", w) for w in range(4)]
    + [("rz", w) for w in range(4)]
    + [("rx", w) for w in range(4)]
    + [("ry", w) for w in range(4)]
)


def init_params(key):
    # mirrors: q_params_enta[q] = pi * torch.rand(3 * n_layers)
    return np.asarray(PI * jax.random.uniform(key, (N_WIRES, 3 * N_LAYERS)),
                      dtype=np.float64)


def u3_entries(theta, phi, lam):
    """2x2 U3 matrix entries ((re, im), ...) as python floats."""
    ct, st = math.cos(theta / 2.0), math.sin(theta / 2.0)
    return (
        (ct, 0.0),                                               # m00
        (-math.cos(lam) * st, -math.sin(lam) * st),              # m01
        (math.cos(phi) * st, math.sin(phi) * st),                # m10
        (math.cos(phi + lam) * ct, math.sin(phi + lam) * ct),    # m11
    )


def build_circuit(design, q_params_enta):
    """Ordered list of variational gates (applied after the encoder).
    Both the U3 rot and the CU3 entangler read q_params_enta, as in TQLayer."""
    gates = []
    for layer in range(N_LAYERS):
        for q in range(N_WIRES):
            p = q_params_enta[q, layer * 3:(layer + 1) * 3]
            ent = u3_entries(float(p[0]), float(p[1]), float(p[2]))
            gates.append(("u3", q, None, ent))
            cw, tw = design[f"enta{layer}{q}"][1]
            if cw != tw:
                gates.append(("cu3", tw, cw, ent))   # (kind, target, control, entries)
    return gates


def build_poolT():
    """(16, 784): avg_pool2d(k=6, s=6) operator over the 28x28 image (only the
    top-left 24x24 region contributes), already transposed so the kernel can
    contract it against image rows kept in their natural (B, 784) layout."""
    P = np.zeros((16, IMG_FLAT), np.float32)
    for i in range(4):
        for j in range(4):
            k = i * 4 + j
            for di in range(6):
                for dj in range(6):
                    P[k, (i * 6 + di) * IMG + (j * 6 + dj)] = 1.0 / 36.0
    return P


def build_fused_variational(var_gates):
    """Fuse all batch-independent variational gates into one 16x16 unitary and
    return (M32, Z4): its real 32x32 block form [[Ur,-Ui],[Ui,Ur]] and the
    PauliZ measurement matrix (4,16).  Amplitude index convention: wire 0 = MSB."""
    def gate16(w, ent, ctrl):
        (ar, ai), (br, bi), (cr, ci), (dr, di) = ent
        m00, m01 = complex(ar, ai), complex(br, bi)
        m10, m11 = complex(cr, ci), complex(dr, di)
        G = np.zeros((16, 16), np.complex128)
        mask = 1 << (3 - w)
        for idx in range(16):
            if ctrl is not None and ((idx >> (3 - ctrl)) & 1) == 0:
                G[idx, idx] = 1.0
                continue
            bit = (idx >> (3 - w)) & 1
            G[idx, idx] = m11 if bit else m00
            G[idx, idx ^ mask] = m10 if bit else m01
        return G

    U = np.eye(16, dtype=np.complex128)
    for kind, w, ctrl, ent in var_gates:          # application order
        U = gate16(w, ent, ctrl if kind == "cu3" else None) @ U

    M32 = np.block([[U.real, -U.imag], [U.imag, U.real]]).astype(np.float32)

    idx = np.arange(16)
    Z4 = (1.0 - 2.0 * ((idx[None, :] >> (3 - np.arange(4))[:, None]) & 1)
          ).astype(np.float32)                    # (4, 16)
    return M32, Z4


# ---------------------------------------------------------------------------
# Pallas kernel
# ---------------------------------------------------------------------------
def qnet_kernel(poolT_ref, m32_ref, z4_ref, x_ref, out_ref):
    f32 = jnp.float32
    TB = x_ref.shape[0]

    # ---- avg_pool2d + flatten straight into lane-dense angles^T (16, TB) ------
    # NT-form contraction: both operands stay in their natural layouts, so there
    # is no wrapper-side HBM transpose and no on-chip transpose here.
    anglesT = lax.dot_general(
        poolT_ref[...], x_ref[...],
        dimension_numbers=(((1,), (1,)), ((), ())),
        preferred_element_type=f32)                                # (16, TB)

    # hoisted transcendentals for all 16 encoder rotations at once
    c_all = jnp.cos(0.5 * anglesT)
    s_all = jnp.sin(0.5 * anglesT)

    # ---- per-row constants over the 3 low bits (wires 1..3) -------------------
    jcol = lax.broadcasted_iota(jnp.int32, (8, 1), 0)              # row index j
    jcolf = jcol.astype(f32)
    sgn, sel, bitf = {}, {}, {}
    for m in (1, 2, 4):
        sgn[m] = jnp.where((jcol & m) != 0, 1.0, -1.0).astype(f32)   # -1 bit0 / +1 bit1
        bitf[m] = jnp.where((jcol & m) != 0, 1.0, 0.0).astype(f32)   # bit value as f32
    for m in (1, 2):
        # does the "+m" roll land on j ^ m on this row?  (runtime probe keeps the
        # select correct regardless of the roll primitive's shift-sign convention)
        sel[m] = pltpu.roll(jcolf, m, 0) == jnp.bitwise_xor(jcol, m).astype(f32)

    def flip(a, m):
        """a[j ^ m] along the 8-row axis of an (8, TB) slab (XLU sublane rolls)."""
        if m == 4:
            return pltpu.roll(a, 4, 0)            # half-period roll == XOR by 4
        return jnp.where(sel[m], pltpu.roll(a, m, 0), pltpu.roll(a, 8 - m, 0))

    # ---- product state after the first four RY encoder gates ------------------
    # RY(t0..t3)|0000> is real with amplitude(b) = prod_w (cos|sin)(t_w/2), so it
    # is built with lane-wise multiplies instead of 4 gates (3 of them flip gates).
    def cs_row(k, mask):
        c = c_all[k:k + 1, :]
        s = s_all[k:k + 1, :]
        return c + bitf[mask] * (s - c)           # (8,TB): c on bit=0 rows, s on bit=1

    prod123 = cs_row(1, 4) * cs_row(2, 2) * cs_row(3, 1)
    r0 = c_all[0:1, :] * prod123                  # wire-0 (MSB) bit = 0 half
    r1 = s_all[0:1, :] * prod123                  # wire-0 (MSB) bit = 1 half
    i0 = jnp.zeros((8, TB), f32)
    i1 = jnp.zeros((8, TB), f32)

    # -------- remaining encoder gates (elementwise on (8, TB) slabs) -----------
    def ry(state, w, c, s):
        r0, i0, r1, i1 = state
        if w == 0:
            return (c * r0 - s * r1, c * i0 - s * i1,
                    s * r0 + c * r1, s * i0 + c * i1)
        m = 1 << (3 - w)
        os_ = sgn[m] * s
        return (c * r0 + os_ * flip(r0, m), c * i0 + os_ * flip(i0, m),
                c * r1 + os_ * flip(r1, m), c * i1 + os_ * flip(i1, m))

    def rz(state, w, c, s):
        r0, i0, r1, i1 = state
        if w == 0:
            return (c * r0 + s * i0, c * i0 - s * r0,
                    c * r1 - s * i1, c * i1 + s * r1)
        m = 1 << (3 - w)
        ss = sgn[m] * s
        return (c * r0 - ss * i0, c * i0 + ss * r0,
                c * r1 - ss * i1, c * i1 + ss * r1)

    def rx(state, w, c, s):
        r0, i0, r1, i1 = state
        if w == 0:
            return (c * r0 + s * i1, c * i0 - s * r1,
                    c * r1 + s * i0, c * i1 - s * r0)
        m = 1 << (3 - w)
        return (c * r0 + s * flip(i0, m), c * i0 - s * flip(r0, m),
                c * r1 + s * flip(i1, m), c * i1 - s * flip(r1, m))

    state = (r0, i0, r1, i1)
    for k in range(4, 16):                        # rz w0..3, rx w0..3, ry w0..3
        func, w = ENC_LIST[k]
        c = c_all[k:k + 1, :]
        s = s_all[k:k + 1, :]
        if func == "rz":
            state = rz(state, w, c, s)
        elif func == "rx":
            state = rx(state, w, c, s)
        else:
            state = ry(state, w, c, s)
    r0, i0, r1, i1 = state

    # ---- fused variational block: one (32,32) x (32,TB) matmul on the MXU -----
    sv = jnp.concatenate([r0, r1, i0, i1], axis=0)                 # [Re; Im] (32,TB)
    nsv = jnp.dot(m32_ref[...], sv, preferred_element_type=f32)    # (32, TB)
    nre = nsv[0:16, :]
    nim = nsv[16:32, :]

    # ---- MeasureAll(PauliZ) as a constant matmul + log_softmax ----------------
    probs = nre * nre + nim * nim                                  # (16, TB)
    e = jnp.dot(z4_ref[...], probs, preferred_element_type=f32)    # (4, TB)

    e0, e1, e2, e3 = e[0:1, :], e[1:2, :], e[2:3, :], e[3:4, :]
    mx = jnp.maximum(jnp.maximum(e0, e1), jnp.maximum(e2, e3))
    lse = jnp.log(jnp.exp(e0 - mx) + jnp.exp(e1 - mx)
                  + jnp.exp(e2 - mx) + jnp.exp(e3 - mx))
    out_ref[...] = e - (mx + lse)                                  # single (4,TB) store


# ---------------------------------------------------------------------------
# Wrapper
# ---------------------------------------------------------------------------
def _round_up(x, m):
    return ((x + m - 1) // m) * m


def qnet_forward(x_image, poolT, m32, z4, *, max_tile=512, min_tiles=2):
    """Full QNet forward: avg_pool -> 4-qubit circuit -> <Z> -> log_softmax."""
    B = x_image.shape[0]
    # Natural (B, 784) layout: free reshape, no crop/transpose copies round-
    # tripping HBM before the kernel (the pooling operator carries the crop).
    # bf16 images are also accepted (the pooling dot accumulates in f32).
    x2d = x_image.reshape(B, IMG_FLAT)
    poolT = poolT.astype(x2d.dtype)

    # Lane-aligned batch tile, capped at 512 to keep the unrolled gate sequence
    # out of vreg-spill territory, and sized so there are >= min_tiles grid
    # steps when possible (keeps both v7x TensorCores busy via "parallel").
    TB = max(128, min(max_tile, _round_up(-(-B // min_tiles), 128)))
    nb = -(-B // TB)
    Bp = nb * TB
    if Bp != B:
        x2d = jnp.pad(x2d, ((0, Bp - B), (0, 0)))

    # TODO(synk): on v5e consider pipeline_mode=pl.Buffered(3) on the image spec
    # to keep the copy engine ahead of the (now short) per-tile compute.
    outT = pl.pallas_call(
        qnet_kernel,
        out_shape=jax.ShapeDtypeStruct((N_WIRES, Bp), jnp.float32),
        grid=(nb,),
        in_specs=[
            pl.BlockSpec((16, IMG_FLAT), lambda i: (0, 0)),     # pooling operator
            pl.BlockSpec((32, 32), lambda i: (0, 0)),           # fused variational unitary
            pl.BlockSpec((4, 16), lambda i: (0, 0)),            # PauliZ signs
            pl.BlockSpec((TB, IMG_FLAT), lambda i: (i, 0)),     # image rows (natural layout)
        ],
        out_specs=pl.BlockSpec((N_WIRES, TB), lambda i: (0, i)),  # lane-dense output
        compiler_params=pltpu.CompilerParams(
            dimension_semantics=("parallel",),
            vmem_limit_bytes=32 * 1024 * 1024),
    )(poolT, m32, z4, x2d)
    return outT[:, :B].T                                         # (B, 4) log-probs


# ---------------------------------------------------------------------------
# Pure-JAX reference (same conventions), used to validate the kernel
# ---------------------------------------------------------------------------
def qnet_reference(x_image, poolT, var_gates):
    B = x_image.shape[0]
    x = x_image.reshape(B, IMG_FLAT).astype(jnp.float32)
    angles = x @ poolT.T                                         # (B, 16)

    idx = np.arange(16)

    def bits(w):
        return jnp.asarray((idx >> (3 - w)) & 1)

    def apply(state, w, m00, m01, m10, m11, control=None):
        mask = 1 << (3 - w)
        flipped = state[:, idx ^ mask]
        b = bits(w)
        d = jnp.where(b == 0, m00, m11)
        o = jnp.where(b == 0, m01, m10)
        new = d * state + o * flipped
        if control is not None:
            new = jnp.where(bits(control) == 1, new, state)
        return new

    state = jnp.zeros((B, 16), jnp.complex64).at[:, 0].set(1.0)
    for k, (func, w) in enumerate(ENC_LIST):
        th = angles[:, k:k + 1]
        c, s = jnp.cos(0.5 * th), jnp.sin(0.5 * th)
        zero = jnp.zeros_like(c) + 0j
        if func == "ry":
            state = apply(state, w, c + 0j, -s + 0j, s + 0j, c + 0j)
        elif func == "rz":
            state = apply(state, w, c - 1j * s, zero, zero, c + 1j * s)
        else:
            state = apply(state, w, c + 0j, -1j * s, -1j * s, c + 0j)

    for kind, w, ctrl, ent in var_gates:
        (ar, ai), (br, bi), (cr, ci), (dr, di) = ent
        m00, m01 = complex(ar, ai), complex(br, bi)
        m10, m11 = complex(cr, ci), complex(dr, di)
        if kind == "u3":
            state = apply(state, w, m00, m01, m10, m11)
        else:
            state = apply(state, w, m00, m01, m10, m11, control=ctrl)

    prob = jnp.abs(state) ** 2
    z = jnp.asarray(1.0 - 2.0 * ((idx[:, None] >> (3 - np.arange(4))[None, :]) & 1),
                    dtype=jnp.float32)                           # (16, 4)
    expz = prob @ z
    return jax.nn.log_softmax(expz, axis=1)


if __name__ == "__main__":
    key = jax.random.PRNGKey(0)
    k_x, k_p = jax.random.split(key)

    B = 2
    x_image = jax.random.normal(k_x, (B, 1, 28, 28), dtype=jnp.float32)

    design = make_design()
    q_params = init_params(k_p)
    var_gates = build_circuit(design, q_params)

    poolT = jnp.asarray(build_poolT())
    M32, Z4 = build_fused_variational(var_gates)
    m32 = jnp.asarray(M32)
    z4 = jnp.asarray(Z4)

    out = qnet_forward(x_image, poolT, m32, z4)
    out = jax.block_until_ready(out)

    # sanity: shape, finiteness, rows exponentiate-sum to 1
    assert out.shape == (B, N_WIRES)
    assert bool(jnp.all(jnp.isfinite(out)))
    assert bool(jnp.allclose(jnp.sum(jnp.exp(out), axis=1), 1.0, atol=1e-4))

    # numerical check against a plain-JAX statevector reference.
    # Tolerance allows for the MXU's default-precision (bf16-pass) rounding of
    # the three f32 matmuls; structural errors would be orders of magnitude larger.
    ref = qnet_reference(x_image, poolT, var_gates)
    assert bool(jnp.allclose(out, ref, atol=5e-3, rtol=5e-3)), (
        "kernel/reference mismatch: max abs diff "
        f"{float(jnp.max(jnp.abs(out - ref)))}")

    print("KERNEL_OK")
</pallas_src>

<mosaic_0001>
module attributes {stable_mosaic.version = 11 : i64} {
  func.func @qnet_kernel(%arg0: i32, %arg1: memref<16x784xf32, #tpu.memory_space<vmem>>, %arg2: memref<32x32xf32, #tpu.memory_space<vmem>>, %arg3: memref<4x16xf32, #tpu.memory_space<vmem>>, %arg4: memref<128x784xf32, #tpu.memory_space<vmem>>, %arg5: memref<4x128xf32, #tpu.memory_space<vmem>>) attributes {dimension_semantics = [#tpu.dimension_semantics<parallel>], iteration_bounds = array<i64: 1>, scalar_prefetch = 0 : i64, scratch_operands = 0 : i64, tpu.core_type = #tpu.core_type<tc>, window_params = [{pipeline_mode = #tpu.pipeline_mode<synchronous>, transform_indices = @transform_0, window_bounds = array<i64: 16, 784>}, {pipeline_mode = #tpu.pipeline_mode<synchronous>, transform_indices = @transform_1, window_bounds = array<i64: 32, 32>}, {pipeline_mode = #tpu.pipeline_mode<synchronous>, transform_indices = @transform_2, window_bounds = array<i64: 4, 16>}, {transform_indices = @transform_3, window_bounds = array<i64: 128, 784>}, {transform_indices = @transform_4, window_bounds = array<i64: 4, 128>}]} {
    %c0 = arith.constant 0 : index
    %c0_0 = arith.constant 0 : index
    %0 = vector.load %arg1[%c0, %c0_0] : memref<16x784xf32, #tpu.memory_space<vmem>>, vector<16x784xf32>
    %c0_1 = arith.constant 0 : index
    %c0_2 = arith.constant 0 : index
    %1 = vector.load %arg4[%c0_1, %c0_2] : memref<128x784xf32, #tpu.memory_space<vmem>>, vector<128x784xf32>
    %cst = arith.constant dense<0.000000e+00> : vector<16x128xf32>
    %2 = tpu.matmul %0, %1, %cst {dimension_numbers = #tpu.dot_dimension_numbers<[1], [1], [0], [0], [0, 0, 1, 0], [], []>} : vector<16x784xf32>, vector<128x784xf32>, vector<16x128xf32> -> vector<16x128xf32>
    %cst_3 = arith.constant 5.000000e-01 : f32
    %3 = vector.broadcast %cst_3 : f32 to vector<16x128xf32>
    %4 = arith.mulf %3, %2 : vector<16x128xf32>
    %5 = math.cos %4 : vector<16x128xf32>
    %cst_4 = arith.constant 5.000000e-01 : f32
    %6 = vector.broadcast %cst_4 : f32 to vector<16x128xf32>
    %7 = arith.mulf %6, %2 : vector<16x128xf32>
    %8 = math.sin %7 : vector<16x128xf32>
    %9 = tpu.iota {dimensions = array<i32: 0>} : vector<8x1xi32>
    %10 = arith.sitofp %9 : vector<8x1xi32> to vector<8x1xf32>
    %c1_i32 = arith.constant 1 : i32
    %11 = vector.broadcast %c1_i32 : i32 to vector<8x1xi32>
    %12 = arith.andi %9, %11 : vector<8x1xi32>
    %c0_i32 = arith.constant 0 : i32
    %13 = vector.broadcast %c0_i32 : i32 to vector<8x1xi32>
    %14 = arith.cmpi ne, %12, %13 : vector<8x1xi32>
    %cst_5 = arith.constant 1.000000e+00 : f32
    %cst_6 = arith.constant -1.000000e+00 : f32
    %15 = vector.broadcast %cst_5 : f32 to vector<8x1xf32>
    %16 = vector.broadcast %cst_6 : f32 to vector<8x1xf32>
    %17 = arith.select %14, %15, %16 : vector<8x1xi1>, vector<8x1xf32>
    %c1_i32_7 = arith.constant 1 : i32
    %18 = vector.broadcast %c1_i32_7 : i32 to vector<8x1xi32>
    %19 = arith.andi %9, %18 : vector<8x1xi32>
    %c0_i32_8 = arith.constant 0 : i32
    %20 = vector.broadcast %c0_i32_8 : i32 to vector<8x1xi32>
    %21 = arith.cmpi ne, %19, %20 : vector<8x1xi32>
    %cst_9 = arith.constant 1.000000e+00 : f32
    %cst_10 = arith.constant 0.000000e+00 : f32
    %22 = vector.broadcast %cst_9 : f32 to vector<8x1xf32>
    %23 = vector.broadcast %cst_10 : f32 to vector<8x1xf32>
    %24 = arith.select %21, %22, %23 : vector<8x1xi1>, vector<8x1xf32>
    %c2_i32 = arith.constant 2 : i32
    %25 = vector.broadcast %c2_i32 : i32 to vector<8x1xi32>
    %26 = arith.andi %9, %25 : vector<8x1xi32>
    %c0_i32_11 = arith.constant 0 : i32
    %27 = vector.broadcast %c0_i32_11 : i32 to vector<8x1xi32>
    %28 = arith.cmpi ne, %26, %27 : vector<8x1xi32>
    %cst_12 = arith.constant 1.000000e+00 : f32
    %cst_13 = arith.constant -1.000000e+00 : f32
    %29 = vector.broadcast %cst_12 : f32 to vector<8x1xf32>
    %30 = vector.broadcast %cst_13 : f32 to vector<8x1xf32>
    %31 = arith.select %28, %29, %30 : vector<8x1xi1>, vector<8x1xf32>
    %c2_i32_14 = arith.constant 2 : i32
    %32 = vector.broadcast %c2_i32_14 : i32 to vector<8x1xi32>
    %33 = arith.andi %9, %32 : vector<8x1xi32>
    %c0_i32_15 = arith.constant 0 : i32
    %34 = vector.broadcast %c0_i32_15 : i32 to vector<8x1xi32>
    %35 = arith.cmpi ne, %33, %34 : vector<8x1xi32>
    %cst_16 = arith.constant 1.000000e+00 : f32
    %cst_17 = arith.constant 0.000000e+00 : f32
    %36 = vector.broadcast %cst_16 : f32 to vector<8x1xf32>
    %37 = vector.broadcast %cst_17 : f32 to vector<8x1xf32>
    %38 = arith.select %35, %36, %37 : vector<8x1xi1>, vector<8x1xf32>
    %c4_i32 = arith.constant 4 : i32
    %39 = vector.broadcast %c4_i32 : i32 to vector<8x1xi32>
    %40 = arith.andi %9, %39 : vector<8x1xi32>
    %c0_i32_18 = arith.constant 0 : i32
    %41 = vector.broadcast %c0_i32_18 : i32 to vector<8x1xi32>
    %42 = arith.cmpi ne, %40, %41 : vector<8x1xi32>
    %cst_19 = arith.constant 1.000000e+00 : f32
    %cst_20 = arith.constant -1.000000e+00 : f32
    %43 = vector.broadcast %cst_19 : f32 to vector<8x1xf32>
    %44 = vector.broadcast %cst_20 : f32 to vector<8x1xf32>
    %45 = arith.select %42, %43, %44 : vector<8x1xi1>, vector<8x1xf32>
    %c4_i32_21 = arith.constant 4 : i32
    %46 = vector.broadcast %c4_i32_21 : i32 to vector<8x1xi32>
    %47 = arith.andi %9, %46 : vector<8x1xi32>
    %c0_i32_22 = arith.constant 0 : i32
    %48 = vector.broadcast %c0_i32_22 : i32 to vector<8x1xi32>
    %49 = arith.cmpi ne, %47, %48 : vector<8x1xi32>
    %cst_23 = arith.constant 1.000000e+00 : f32
    %cst_24 = arith.constant 0.000000e+00 : f32
    %50 = vector.broadcast %cst_23 : f32 to vector<8x1xf32>
    %51 = vector.broadcast %cst_24 : f32 to vector<8x1xf32>
    %52 = arith.select %49, %50, %51 : vector<8x1xi1>, vector<8x1xf32>
    %c1_i32_25 = arith.constant 1 : i32
    %53 = tpu.dynamic_rotate %10 by %c1_i32_25 dim 0 : vector<8x1xf32>, i32 -> vector<8x1xf32>
    %c1_i32_26 = arith.constant 1 : i32
    %54 = vector.broadcast %c1_i32_26 : i32 to vector<8x1xi32>
    %55 = arith.xori %9, %54 : vector<8x1xi32>
    %56 = arith.sitofp %55 : vector<8x1xi32> to vector<8x1xf32>
    %57 = arith.cmpf oeq, %53, %56 : vector<8x1xf32>
    %c2_i32_27 = arith.constant 2 : i32
    %58 = tpu.dynamic_rotate %10 by %c2_i32_27 dim 0 : vector<8x1xf32>, i32 -> vector<8x1xf32>
    %c2_i32_28 = arith.constant 2 : i32
    %59 = vector.broadcast %c2_i32_28 : i32 to vector<8x1xi32>
    %60 = arith.xori %9, %59 : vector<8x1xi32>
    %61 = arith.sitofp %60 : vector<8x1xi32> to vector<8x1xf32>
    %62 = arith.cmpf oeq, %58, %61 : vector<8x1xf32>
    %63 = vector.extract_strided_slice %5 {offsets = [1, 0], sizes = [1, 128], strides = [1, 1]} : vector<16x128xf32> to vector<1x128xf32>
    %64 = vector.extract_strided_slice %8 {offsets = [1, 0], sizes = [1, 128], strides = [1, 1]} : vector<16x128xf32> to vector<1x128xf32>
    %65 = arith.subf %64, %63 : vector<1x128xf32>
    %66 = vector.broadcast %52 : vector<8x1xf32> to vector<8x128xf32>
    %67 = vector.broadcast %65 : vector<1x128xf32> to vector<8x128xf32>
    %68 = arith.mulf %66, %67 : vector<8x128xf32>
    %69 = vector.broadcast %63 : vector<1x128xf32> to vector<8x128xf32>
    %70 = arith.addf %69, %68 : vector<8x128xf32>
    %71 = vector.extract_strided_slice %5 {offsets = [2, 0], sizes = [1, 128], strides = [1, 1]} : vector<16x128xf32> to vector<1x128xf32>
    %72 = vector.extract_strided_slice %8 {offsets = [2, 0], sizes = [1, 128], strides = [1, 1]} : vector<16x128xf32> to vector<1x128xf32>
    %73 = arith.subf %72, %71 : vector<1x128xf32>
    %74 = vector.broadcast %38 : vector<8x1xf32> to vector<8x128xf32>
    %75 = vector.broadcast %73 : vector<1x128xf32> to vector<8x128xf32>
    %76 = arith.mulf %74, %75 : vector<8x128xf32>
    %77 = vector.broadcast %71 : vector<1x128xf32> to vector<8x128xf32>
    %78 = arith.addf %77, %76 : vector<8x128xf32>
    %79 = arith.mulf %70, %78 : vector<8x128xf32>
    %80 = vector.extract_strided_slice %5 {offsets = [3, 0], sizes = [1, 128], strides = [1, 1]} : vector<16x128xf32> to vector<1x128xf32>
    %81 = vector.extract_strided_slice %8 {offsets = [3, 0], sizes = [1, 128], strides = [1, 1]} : vector<16x128xf32> to vector<1x128xf32>
    %82 = arith.subf %81, %80 : vector<1x128xf32>
    %83 = vector.broadcast %24 : vector<8x1xf32> to vector<8x128xf32>
    %84 = vector.broadcast %82 : vector<1x128xf32> to vector<8x128xf32>
    %85 = arith.mulf %83, %84 : vector<8x128xf32>
    %86 = vector.broadcast %80 : vector<1x128xf32> to vector<8x128xf32>
    %87 = arith.addf %86, %85 : vector<8x128xf32>
    %88 = arith.mulf %79, %87 : vector<8x128xf32>
    %89 = vector.extract_strided_slice %5 {offsets = [0, 0], sizes = [1, 128], strides = [1, 1]} : vector<16x128xf32> to vector<1x128xf32>
    %90 = vector.broadcast %89 : vector<1x128xf32> to vector<8x128xf32>
    %91 = arith.mulf %90, %88 : vector<8x128xf32>
    %92 = vector.extract_strided_slice %8 {offsets = [0, 0], sizes = [1, 128], strides = [1, 1]} : vector<16x128xf32> to vector<1x128xf32>
    %93 = vector.broadcast %92 : vector<1x128xf32> to vector<8x128xf32>
    %94 = arith.mulf %93, %88 : vector<8x128xf32>
    %cst_29 = arith.constant 0.000000e+00 : f32
    %95 = vector.broadcast %cst_29 : f32 to vector<8x128xf32>
    %cst_30 = arith.constant 0.000000e+00 : f32
    %96 = vector.broadcast %cst_30 : f32 to vector<8x128xf32>
    %97 = vector.extract_strided_slice %5 {offsets = [4, 0], sizes = [1, 128], strides = [1, 1]} : vector<16x128xf32> to vector<1x128xf32>
    %98 = vector.extract_strided_slice %8 {offsets = [4, 0], sizes = [1, 128], strides = [1, 1]} : vector<16x128xf32> to vector<1x128xf32>
    %99 = vector.broadcast %97 : vector<1x128xf32> to vector<8x128xf32>
    %100 = arith.mulf %99, %91 : vector<8x128xf32>
    %101 = vector.broadcast %98 : vector<1x128xf32> to vector<8x128xf32>
    %102 = arith.mulf %101, %95 : vector<8x128xf32>
    %103 = arith.addf %100, %102 : vector<8x128xf32>
    %104 = vector.broadcast %97 : vector<1x128xf32> to vector<8x128xf32>
    %105 = arith.mulf %104, %95 : vector<8x128xf32>
    %106 = vector.broadcast %98 : vector<1x128xf32> to vector<8x128xf32>
    %107 = arith.mulf %106, %91 : vector<8x128xf32>
    %108 = arith.subf %105, %107 : vector<8x128xf32>
    %109 = vector.broadcast %97 : vector<1x128xf32> to vector<8x128xf32>
    %110 = arith.mulf %109, %94 : vector<8x128xf32>
    %111 = vector.broadcast %98 : vector<1x128xf32> to vector<8x128xf32>
    %112 = arith.mulf %111, %96 : vector<8x128xf32>
    %113 = arith.subf %110, %112 : vector<8x128xf32>
    %114 = vector.broadcast %97 : vector<1x128xf32> to vector<8x128xf32>
    %115 = arith.mulf %114, %96 : vector<8x128xf32>
    %116 = vector.broadcast %98 : vector<1x128xf32> to vector<8x128xf32>
    %117 = arith.mulf %116, %94 : vector<8x128xf32>
    %118 = arith.addf %115, %117 : vector<8x128xf32>
    %119 = vector.extract_strided_slice %5 {offsets = [5, 0], sizes = [1, 128], strides = [1, 1]} : vector<16x128xf32> to vector<1x128xf32>
    %120 = vector.extract_strided_slice %8 {offsets = [5, 0], sizes = [1, 128], strides = [1, 1]} : vector<16x128xf32> to vector<1x128xf32>
    %121 = vector.broadcast %45 : vector<8x1xf32> to vector<8x128xf32>
    %122 = vector.broadcast %120 : vector<1x128xf32> to vector<8x128xf32>
    %123 = arith.mulf %121, %122 : vector<8x128xf32>
    %124 = vector.broadcast %119 : vector<1x128xf32> to vector<8x128xf32>
    %125 = arith.mulf %124, %103 : vector<8x128xf32>
    %126 = arith.mulf %123, %108 : vector<8x128xf32>
    %127 = arith.subf %125, %126 : vector<8x128xf32>
    %128 = vector.broadcast %119 : vector<1x128xf32> to vector<8x128xf32>
    %129 = arith.mulf %128, %108 : vector<8x128xf32>
    %130 = arith.mulf %123, %103 : vector<8x128xf32>
    %131 = arith.addf %129, %130 : vector<8x128xf32>
    %132 = vector.broadcast %119 : vector<1x128xf32> to vector<8x128xf32>
    %133 = arith.mulf %132, %113 : vector<8x128xf32>
    %134 = arith.mulf %123, %118 : vector<8x128xf32>
    %135 = arith.subf %133, %134 : vector<8x128xf32>
    %136 = vector.broadcast %119 : vector<1x128xf32> to vector<8x128xf32>
    %137 = arith.mulf %136, %118 : vector<8x128xf32>
    %138 = arith.mulf %123, %113 : vector<8x128xf32>
    %139 = arith.addf %137, %138 : vector<8x128xf32>
    %140 = vector.extract_strided_slice %5 {offsets = [6, 0], sizes = [1, 128], strides = [1, 1]} : vector<16x128xf32> to vector<1x128xf32>
    %141 = vector.extract_strided_slice %8 {offsets = [6, 0], sizes = [1, 128], strides = [1, 1]} : vector<16x128xf32> to vector<1x128xf32>
    %142 = vector.broadcast %31 : vector<8x1xf32> to vector<8x128xf32>
    %143 = vector.broadcast %141 : vector<1x128xf32> to vector<8x128xf32>
    %144 = arith.mulf %142, %143 : vector<8x128xf32>
    %145 = vector.broadcast %140 : vector<1x128xf32> to vector<8x128xf32>
    %146 = arith.mulf %145, %127 : vector<8x128xf32>
    %147 = arith.mulf %144, %131 : vector<8x128xf32>
    %148 = arith.subf %146, %147 : vector<8x128xf32>
    %149 = vector.broadcast %140 : vector<1x128xf32> to vector<8x128xf32>
    %150 = arith.mulf %149, %131 : vector<8x128xf32>
    %151 = arith.mulf %144, %127 : vector<8x128xf32>
    %152 = arith.addf %150, %151 : vector<8x128xf32>
    %153 = vector.broadcast %140 : vector<1x128xf32> to vector<8x128xf32>
    %154 = arith.mulf %153, %135 : vector<8x128xf32>
    %155 = arith.mulf %144, %139 : vector<8x128xf32>
    %156 = arith.subf %154, %155 : vector<8x128xf32>
    %157 = vector.broadcast %140 : vector<1x128xf32> to vector<8x128xf32>
    %158 = arith.mulf %157, %139 : vector<8x128xf32>
    %159 = arith.mulf %144, %135 : vector<8x128xf32>
    %160 = arith.addf %158, %159 : vector<8x128xf32>
    %161 = vector.extract_strided_slice %5 {offsets = [7, 0], sizes = [1, 128], strides = [1, 1]} : vector<16x128xf32> to vector<1x128xf32>
    %162 = vector.extract_strided_slice %8 {offsets = [7, 0], sizes = [1, 128], strides = [1, 1]} : vector<16x128xf32> to vector<1x128xf32>
    %163 = vector.broadcast %17 : vector<8x1xf32> to vector<8x128xf32>
    %164 = vector.broadcast %162 : vector<1x128xf32> to vector<8x128xf32>
    %165 = arith.mulf %163, %164 : vector<8x128xf32>
    %166 = vector.broadcast %161 : vector<1x128xf32> to vector<8x128xf32>
    %167 = arith.mulf %166, %148 : vector<8x128xf32>
    %168 = arith.mulf %165, %152 : vector<8x128xf32>
    %169 = arith.subf %167, %168 : vector<8x128xf32>
    %170 = vector.broadcast %161 : vector<1x128xf32> to vector<8x128xf32>
    %171 = arith.mulf %170, %152 : vector<8x128xf32>
    %172 = arith.mulf %165, %148 : vector<8x128xf32>
    %173 = arith.addf %171, %172 : vector<8x128xf32>
    %174 = vector.broadcast %161 : vector<1x128xf32> to vector<8x128xf32>
    %175 = arith.mulf %174, %156 : vector<8x128xf32>
    %176 = arith.mulf %165, %160 : vector<8x128xf32>
    %177 = arith.subf %175, %176 : vector<8x128xf32>
    %178 = vector.broadcast %161 : vector<1x128xf32> to vector<8x128xf32>
    %179 = arith.mulf %178, %160 : vector<8x128xf32>
    %180 = arith.mulf %165, %156 : vector<8x128xf32>
    %181 = arith.addf %179, %180 : vector<8x128xf32>
    %182 = vector.extract_strided_slice %5 {offsets = [8, 0], sizes = [1, 128], strides = [1, 1]} : vector<16x128xf32> to vector<1x128xf32>
    %183 = vector.extract_strided_slice %8 {offsets = [8, 0], sizes = [1, 128], strides = [1, 1]} : vector<16x128xf32> to vector<1x128xf32>
    %184 = vector.broadcast %182 : vector<1x128xf32> to vector<8x128xf32>
    %185 = arith.mulf %184, %169 : vector<8x128xf32>
    %186 = vector.broadcast %183 : vector<1x128xf32> to vector<8x128xf32>
    %187 = arith.mulf %186, %181 : vector<8x128xf32>
    %188 = arith.addf %185, %187 : vector<8x128xf32>
    %189 = vector.broadcast %182 : vector<1x128xf32> to vector<8x128xf32>
    %190 = arith.mulf %189, %173 : vector<8x128xf32>
    %191 = vector.broadcast %183 : vector<1x128xf32> to vector<8x128xf32>
    %192 = arith.mulf %191, %177 : vector<8x128xf32>
    %193 = arith.subf %190, %192 : vector<8x128xf32>
    %194 = vector.broadcast %182 : vector<1x128xf32> to vector<8x128xf32>
    %195 = arith.mulf %194, %177 : vector<8x128xf32>
    %196 = vector.broadcast %183 : vector<1x128xf32> to vector<8x128xf32>
    %197 = arith.mulf %196, %173 : vector<8x128xf32>
    %198 = arith.addf %195, %197 : vector<8x128xf32>
    %199 = vector.broadcast %182 : vector<1x128xf32> to vector<8x128xf32>
    %200 = arith.mulf %199, %181 : vector<8x128xf32>
    %201 = vector.broadcast %183 : vector<1x128xf32> to vector<8x128xf32>
    %202 = arith.mulf %201, %169 : vector<8x128xf32>
    %203 = arith.subf %200, %202 : vector<8x128xf32>
    %204 = vector.extract_strided_slice %5 {offsets = [9, 0], sizes = [1, 128], strides = [1, 1]} : vector<16x128xf32> to vector<1x128xf32>
    %205 = vector.extract_strided_slice %8 {offsets = [9, 0], sizes = [1, 128], strides = [1, 1]} : vector<16x128xf32> to vector<1x128xf32>
    %206 = vector.broadcast %204 : vector<1x128xf32> to vector<8x128xf32>
    %207 = arith.mulf %206, %188 : vector<8x128xf32>
    %c4_i32_31 = arith.constant 4 : i32
    %208 = tpu.dynamic_rotate %193 by %c4_i32_31 dim 0 : vector<8x128xf32>, i32 -> vector<8x128xf32>
    %209 = vector.broadcast %205 : vector<1x128xf32> to vector<8x128xf32>
    %210 = arith.mulf %209, %208 : vector<8x128xf32>
    %211 = arith.addf %207, %210 : vector<8x128xf32>
    %212 = vector.broadcast %204 : vector<1x128xf32> to vector<8x128xf32>
    %213 = arith.mulf %212, %193 : vector<8x128xf32>
    %c4_i32_32 = arith.constant 4 : i32
    %214 = tpu.dynamic_rotate %188 by %c4_i32_32 dim 0 : vector<8x128xf32>, i32 -> vector<8x128xf32>
    %215 = vector.broadcast %205 : vector<1x128xf32> to vector<8x128xf32>
    %216 = arith.mulf %215, %214 : vector<8x128xf32>
    %217 = arith.subf %213, %216 : vector<8x128xf32>
    %218 = vector.broadcast %204 : vector<1x128xf32> to vector<8x128xf32>
    %219 = arith.mulf %218, %198 : vector<8x128xf32>
    %c4_i32_33 = arith.constant 4 : i32
    %220 = tpu.dynamic_rotate %203 by %c4_i32_33 dim 0 : vector<8x128xf32>, i32 -> vector<8x128xf32>
    %221 = vector.broadcast %205 : vector<1x128xf32> to vector<8x128xf32>
    %222 = arith.mulf %221, %220 : vector<8x128xf32>
    %223 = arith.addf %219, %222 : vector<8x128xf32>
    %224 = vector.broadcast %204 : vector<1x128xf32> to vector<8x128xf32>
    %225 = arith.mulf %224, %203 : vector<8x128xf32>
    %c4_i32_34 = arith.constant 4 : i32
    %226 = tpu.dynamic_rotate %198 by %c4_i32_34 dim 0 : vector<8x128xf32>, i32 -> vector<8x128xf32>
    %227 = vector.broadcast %205 : vector<1x128xf32> to vector<8x128xf32>
    %228 = arith.mulf %227, %226 : vector<8x128xf32>
    %229 = arith.subf %225, %228 : vector<8x128xf32>
    %230 = vector.extract_strided_slice %5 {offsets = [10, 0], sizes = [1, 128], strides = [1, 1]} : vector<16x128xf32> to vector<1x128xf32>
    %231 = vector.extract_strided_slice %8 {offsets = [10, 0], sizes = [1, 128], strides = [1, 1]} : vector<16x128xf32> to vector<1x128xf32>
    %232 = vector.broadcast %230 : vector<1x128xf32> to vector<8x128xf32>
    %233 = arith.mulf %232, %211 : vector<8x128xf32>
    %c2_i32_35 = arith.constant 2 : i32
    %234 = tpu.dynamic_rotate %217 by %c2_i32_35 dim 0 : vector<8x128xf32>, i32 -> vector<8x128xf32>
    %c6_i32 = arith.constant 6 : i32
    %235 = tpu.dynamic_rotate %217 by %c6_i32 dim 0 : vector<8x128xf32>, i32 -> vector<8x128xf32>
    %236 = vector.shape_cast %62 : vector<8x1xi1> to vector<8x1xi1>
    %237 = vector.broadcast %236 : vector<8x1xi1> to vector<8x128xi1>
    %238 = arith.select %237, %234, %235 : vector<8x128xi1>, vector<8x128xf32>
    %239 = vector.broadcast %231 : vector<1x128xf32> to vector<8x128xf32>
    %240 = arith.mulf %239, %238 : vector<8x128xf32>
    %241 = arith.addf %233, %240 : vector<8x128xf32>
    %242 = vector.broadcast %230 : vector<1x128xf32> to vector<8x128xf32>
    %243 = arith.mulf %242, %217 : vector<8x128xf32>
    %c2_i32_36 = arith.constant 2 : i32
    %244 = tpu.dynamic_rotate %211 by %c2_i32_36 dim 0 : vector<8x128xf32>, i32 -> vector<8x128xf32>
    %c6_i32_37 = arith.constant 6 : i32
    %245 = tpu.dynamic_rotate %211 by %c6_i32_37 dim 0 : vector<8x128xf32>, i32 -> vector<8x128xf32>
    %246 = vector.shape_cast %62 : vector<8x1xi1> to vector<8x1xi1>
    %247 = vector.broadcast %246 : vector<8x1xi1> to vector<8x128xi1>
    %248 = arith.select %247, %244, %245 : vector<8x128xi1>, vector<8x128xf32>
    %249 = vector.broadcast %231 : vector<1x128xf32> to vector<8x128xf32>
    %250 = arith.mulf %249, %248 : vector<8x128xf32>
    %251 = arith.subf %243, %250 : vector<8x128xf32>
    %252 = vector.broadcast %230 : vector<1x128xf32> to vector<8x128xf32>
    %253 = arith.mulf %252, %223 : vector<8x128xf32>
    %c2_i32_38 = arith.constant 2 : i32
    %254 = tpu.dynamic_rotate %229 by %c2_i32_38 dim 0 : vector<8x128xf32>, i32 -> vector<8x128xf32>
    %c6_i32_39 = arith.constant 6 : i32
    %255 = tpu.dynamic_rotate %229 by %c6_i32_39 dim 0 : vector<8x128xf32>, i32 -> vector<8x128xf32>
    %256 = vector.shape_cast %62 : vector<8x1xi1> to vector<8x1xi1>
    %257 = vector.broadcast %256 : vector<8x1xi1> to vector<8x128xi1>
    %258 = arith.select %257, %254, %255 : vector<8x128xi1>, vector<8x128xf32>
    %259 = vector.broadcast %231 : vector<1x128xf32> to vector<8x128xf32>
    %260 = arith.mulf %259, %258 : vector<8x128xf32>
    %261 = arith.addf %253, %260 : vector<8x128xf32>
    %262 = vector.broadcast %230 : vector<1x128xf32> to vector<8x128xf32>
    %263 = arith.mulf %262, %229 : vector<8x128xf32>
    %c2_i32_40 = arith.constant 2 : i32
    %264 = tpu.dynamic_rotate %223 by %c2_i32_40 dim 0 : vector<8x128xf32>, i32 -> vector<8x128xf32>
    %c6_i32_41 = arith.constant 6 : i32
    %265 = tpu.dynamic_rotate %223 by %c6_i32_41 dim 0 : vector<8x128xf32>, i32 -> vector<8x128xf32>
    %266 = vector.shape_cast %62 : vector<8x1xi1> to vector<8x1xi1>
    %267 = vector.broadcast %266 : vector<8x1xi1> to vector<8x128xi1>
    %268 = arith.select %267, %264, %265 : vector<8x128xi1>, vector<8x128xf32>
    %269 = vector.broadcast %231 : vector<1x128xf32> to vector<8x128xf32>
    %270 = arith.mulf %269, %268 : vector<8x128xf32>
    %271 = arith.subf %263, %270 : vector<8x128xf32>
    %272 = vector.extract_strided_slice %5 {offsets = [11, 0], sizes = [1, 128], strides = [1, 1]} : vector<16x128xf32> to vector<1x128xf32>
    %273 = vector.extract_strided_slice %8 {offsets = [11, 0], sizes = [1, 128], strides = [1, 1]} : vector<16x128xf32> to vector<1x128xf32>
    %274 = vector.broadcast %272 : vector<1x128xf32> to vector<8x128xf32>
    %275 = arith.mulf %274, %241 : vector<8x128xf32>
    %c1_i32_42 = arith.constant 1 : i32
    %276 = tpu.dynamic_rotate %251 by %c1_i32_42 dim 0 : vector<8x128xf32>, i32 -> vector<8x128xf32>
    %c7_i32 = arith.constant 7 : i32
    %277 = tpu.dynamic_rotate %251 by %c7_i32 dim 0 : vector<8x128xf32>, i32 -> vector<8x128xf32>
    %278 = vector.shape_cast %57 : vector<8x1xi1> to vector<8x1xi1>
    %279 = vector.broadcast %278 : vector<8x1xi1> to vector<8x128xi1>
    %280 = arith.select %279, %276, %277 : vector<8x128xi1>, vector<8x128xf32>
    %281 = vector.broadcast %273 : vector<1x128xf32> to vector<8x128xf32>
    %282 = arith.mulf %281, %280 : vector<8x128xf32>
    %283 = arith.addf %275, %282 : vector<8x128xf32>
    %284 = vector.broadcast %272 : vector<1x128xf32> to vector<8x128xf32>
    %285 = arith.mulf %284, %251 : vector<8x128xf32>
    %c1_i32_43 = arith.constant 1 : i32
    %286 = tpu.dynamic_rotate %241 by %c1_i32_43 dim 0 : vector<8x128xf32>, i32 -> vector<8x128xf32>
    %c7_i32_44 = arith.constant 7 : i32
    %287 = tpu.dynamic_rotate %241 by %c7_i32_44 dim 0 : vector<8x128xf32>, i32 -> vector<8x128xf32>
    %288 = vector.shape_cast %57 : vector<8x1xi1> to vector<8x1xi1>
    %289 = vector.broadcast %288 : vector<8x1xi1> to vector<8x128xi1>
    %290 = arith.select %289, %286, %287 : vector<8x128xi1>, vector<8x128xf32>
    %291 = vector.broadcast %273 : vector<1x128xf32> to vector<8x128xf32>
    %292 = arith.mulf %291, %290 : vector<8x128xf32>
    %293 = arith.subf %285, %292 : vector<8x128xf32>
    %294 = vector.broadcast %272 : vector<1x128xf32> to vector<8x128xf32>
    %295 = arith.mulf %294, %261 : vector<8x128xf32>
    %c1_i32_45 = arith.constant 1 : i32
    %296 = tpu.dynamic_rotate %271 by %c1_i32_45 dim 0 : vector<8x128xf32>, i32 -> vector<8x128xf32>
    %c7_i32_46 = arith.constant 7 : i32
    %297 = tpu.dynamic_rotate %271 by %c7_i32_46 dim 0 : vector<8x128xf32>, i32 -> vector<8x128xf32>
    %298 = vector.shape_cast %57 : vector<8x1xi1> to vector<8x1xi1>
    %299 = vector.broadcast %298 : vector<8x1xi1> to vector<8x128xi1>
    %300 = arith.select %299, %296, %297 : vector<8x128xi1>, vector<8x128xf32>
    %301 = vector.broadcast %273 : vector<1x128xf32> to vector<8x128xf32>
    %302 = arith.mulf %301, %300 : vector<8x128xf32>
    %303 = arith.addf %295, %302 : vector<8x128xf32>
    %304 = vector.broadcast %272 : vector<1x128xf32> to vector<8x128xf32>
    %305 = arith.mulf %304, %271 : vector<8x128xf32>
    %c1_i32_47 = arith.constant 1 : i32
    %306 = tpu.dynamic_rotate %261 by %c1_i32_47 dim 0 : vector<8x128xf32>, i32 -> vector<8x128xf32>
    %c7_i32_48 = arith.constant 7 : i32
    %307 = tpu.dynamic_rotate %261 by %c7_i32_48 dim 0 : vector<8x128xf32>, i32 -> vector<8x128xf32>
    %308 = vector.shape_cast %57 : vector<8x1xi1> to vector<8x1xi1>
    %309 = vector.broadcast %308 : vector<8x1xi1> to vector<8x128xi1>
    %310 = arith.select %309, %306, %307 : vector<8x128xi1>, vector<8x128xf32>
    %311 = vector.broadcast %273 : vector<1x128xf32> to vector<8x128xf32>
    %312 = arith.mulf %311, %310 : vector<8x128xf32>
    %313 = arith.subf %305, %312 : vector<8x128xf32>
    %314 = vector.extract_strided_slice %5 {offsets = [12, 0], sizes = [1, 128], strides = [1, 1]} : vector<16x128xf32> to vector<1x128xf32>
    %315 = vector.extract_strided_slice %8 {offsets = [12, 0], sizes = [1, 128], strides = [1, 1]} : vector<16x128xf32> to vector<1x128xf32>
    %316 = vector.broadcast %314 : vector<1x128xf32> to vector<8x128xf32>
    %317 = arith.mulf %316, %283 : vector<8x128xf32>
    %318 = vector.broadcast %315 : vector<1x128xf32> to vector<8x128xf32>
    %319 = arith.mulf %318, %303 : vector<8x128xf32>
    %320 = arith.subf %317, %319 : vector<8x128xf32>
    %321 = vector.broadcast %314 : vector<1x128xf32> to vector<8x128xf32>
    %322 = arith.mulf %321, %293 : vector<8x128xf32>
    %323 = vector.broadcast %315 : vector<1x128xf32> to vector<8x128xf32>
    %324 = arith.mulf %323, %313 : vector<8x128xf32>
    %325 = arith.subf %322, %324 : vector<8x128xf32>
    %326 = vector.broadcast %315 : vector<1x128xf32> to vector<8x128xf32>
    %327 = arith.mulf %326, %283 : vector<8x128xf32>
    %328 = vector.broadcast %314 : vector<1x128xf32> to vector<8x128xf32>
    %329 = arith.mulf %328, %303 : vector<8x128xf32>
    %330 = arith.addf %327, %329 : vector<8x128xf32>
    %331 = vector.broadcast %315 : vector<1x128xf32> to vector<8x128xf32>
    %332 = arith.mulf %331, %293 : vector<8x128xf32>
    %333 = vector.broadcast %314 : vector<1x128xf32> to vector<8x128xf32>
    %334 = arith.mulf %333, %313 : vector<8x128xf32>
    %335 = arith.addf %332, %334 : vector<8x128xf32>
    %336 = vector.extract_strided_slice %5 {offsets = [13, 0], sizes = [1, 128], strides = [1, 1]} : vector<16x128xf32> to vector<1x128xf32>
    %337 = vector.extract_strided_slice %8 {offsets = [13, 0], sizes = [1, 128], strides = [1, 1]} : vector<16x128xf32> to vector<1x128xf32>
    %338 = vector.broadcast %45 : vector<8x1xf32> to vector<8x128xf32>
    %339 = vector.broadcast %337 : vector<1x128xf32> to vector<8x128xf32>
    %340 = arith.mulf %338, %339 : vector<8x128xf32>
    %341 = vector.broadcast %336 : vector<1x128xf32> to vector<8x128xf32>
    %342 = arith.mulf %341, %320 : vector<8x128xf32>
    %c4_i32_49 = arith.constant 4 : i32
    %343 = tpu.dynamic_rotate %320 by %c4_i32_49 dim 0 : vector<8x128xf32>, i32 -> vector<8x128xf32>
    %344 = arith.mulf %340, %343 : vector<8x128xf32>
    %345 = arith.addf %342, %344 : vector<8x128xf32>
    %346 = vector.broadcast %336 : vector<1x128xf32> to vector<8x128xf32>
    %347 = arith.mulf %346, %325 : vector<8x128xf32>
    %c4_i32_50 = arith.constant 4 : i32
    %348 = tpu.dynamic_rotate %325 by %c4_i32_50 dim 0 : vector<8x128xf32>, i32 -> vector<8x128xf32>
    %349 = arith.mulf %340, %348 : vector<8x128xf32>
    %350 = arith.addf %347, %349 : vector<8x128xf32>
    %351 = vector.broadcast %336 : vector<1x128xf32> to vector<8x128xf32>
    %352 = arith.mulf %351, %330 : vector<8x128xf32>
    %c4_i32_51 = arith.constant 4 : i32
    %353 = tpu.dynamic_rotate %330 by %c4_i32_51 dim 0 : vector<8x128xf32>, i32 -> vector<8x128xf32>
    %354 = arith.mulf %340, %353 : vector<8x128xf32>
    %355 = arith.addf %352, %354 : vector<8x128xf32>
    %356 = vector.broadcast %336 : vector<1x128xf32> to vector<8x128xf32>
    %357 = arith.mulf %356, %335 : vector<8x128xf32>
    %c4_i32_52 = arith.constant 4 : i32
    %358 = tpu.dynamic_rotate %335 by %c4_i32_52 dim 0 : vector<8x128xf32>, i32 -> vector<8x128xf32>
    %359 = arith.mulf %340, %358 : vector<8x128xf32>
    %360 = arith.addf %357, %359 : vector<8x128xf32>
    %361 = vector.extract_strided_slice %5 {offsets = [14, 0], sizes = [1, 128], strides = [1, 1]} : vector<16x128xf32> to vector<1x128xf32>
    %362 = vector.extract_strided_slice %8 {offsets = [14, 0], sizes = [1, 128], strides = [1, 1]} : vector<16x128xf32> to vector<1x128xf32>
    %363 = vector.broadcast %31 : vector<8x1xf32> to vector<8x128xf32>
    %364 = vector.broadcast %362 : vector<1x128xf32> to vector<8x128xf32>
    %365 = arith.mulf %363, %364 : vector<8x128xf32>
    %366 = vector.broadcast %361 : vector<1x128xf32> to vector<8x128xf32>
    %367 = arith.mulf %366, %345 : vector<8x128xf32>
    %c2_i32_53 = arith.constant 2 : i32
    %368 = tpu.dynamic_rotate %345 by %c2_i32_53 dim 0 : vector<8x128xf32>, i32 -> vector<8x128xf32>
    %c6_i32_54 = arith.constant 6 : i32
    %369 = tpu.dynamic_rotate %345 by %c6_i32_54 dim 0 : vector<8x128xf32>, i32 -> vector<8x128xf32>
    %370 = vector.shape_cast %62 : vector<8x1xi1> to vector<8x1xi1>
    %371 = vector.broadcast %370 : vector<8x1xi1> to vector<8x128xi1>
    %372 = arith.select %371, %368, %369 : vector<8x128xi1>, vector<8x128xf32>
    %373 = arith.mulf %365, %372 : vector<8x128xf32>
    %374 = arith.addf %367, %373 : vector<8x128xf32>
    %375 = vector.broadcast %361 : vector<1x128xf32> to vector<8x128xf32>
    %376 = arith.mulf %375, %350 : vector<8x128xf32>
    %c2_i32_55 = arith.constant 2 : i32
    %377 = tpu.dynamic_rotate %350 by %c2_i32_55 dim 0 : vector<8x128xf32>, i32 -> vector<8x128xf32>
    %c6_i32_56 = arith.constant 6 : i32
    %378 = tpu.dynamic_rotate %350 by %c6_i32_56 dim 0 : vector<8x128xf32>, i32 -> vector<8x128xf32>
    %379 = vector.shape_cast %62 : vector<8x1xi1> to vector<8x1xi1>
    %380 = vector.broadcast %379 : vector<8x1xi1> to vector<8x128xi1>
    %381 = arith.select %380, %377, %378 : vector<8x128xi1>, vector<8x128xf32>
    %382 = arith.mulf %365, %381 : vector<8x128xf32>
    %383 = arith.addf %376, %382 : vector<8x128xf32>
    %384 = vector.broadcast %361 : vector<1x128xf32> to vector<8x128xf32>
    %385 = arith.mulf %384, %355 : vector<8x128xf32>
    %c2_i32_57 = arith.constant 2 : i32
    %386 = tpu.dynamic_rotate %355 by %c2_i32_57 dim 0 : vector<8x128xf32>, i32 -> vector<8x128xf32>
    %c6_i32_58 = arith.constant 6 : i32
    %387 = tpu.dynamic_rotate %355 by %c6_i32_58 dim 0 : vector<8x128xf32>, i32 -> vector<8x128xf32>
    %388 = vector.shape_cast %62 : vector<8x1xi1> to vector<8x1xi1>
    %389 = vector.broadcast %388 : vector<8x1xi1> to vector<8x128xi1>
    %390 = arith.select %389, %386, %387 : vector<8x128xi1>, vector<8x128xf32>
    %391 = arith.mulf %365, %390 : vector<8x128xf32>
    %392 = arith.addf %385, %391 : vector<8x128xf32>
    %393 = vector.broadcast %361 : vector<1x128xf32> to vector<8x128xf32>
    %394 = arith.mulf %393, %360 : vector<8x128xf32>
    %c2_i32_59 = arith.constant 2 : i32
    %395 = tpu.dynamic_rotate %360 by %c2_i32_59 dim 0 : vector<8x128xf32>, i32 -> vector<8x128xf32>
    %c6_i32_60 = arith.constant 6 : i32
    %396 = tpu.dynamic_rotate %360 by %c6_i32_60 dim 0 : vector<8x128xf32>, i32 -> vector<8x128xf32>
    %397 = vector.shape_cast %62 : vector<8x1xi1> to vector<8x1xi1>
    %398 = vector.broadcast %397 : vector<8x1xi1> to vector<8x128xi1>
    %399 = arith.select %398, %395, %396 : vector<8x128xi1>, vector<8x128xf32>
    %400 = arith.mulf %365, %399 : vector<8x128xf32>
    %401 = arith.addf %394, %400 : vector<8x128xf32>
    %402 = vector.extract_strided_slice %5 {offsets = [15, 0], sizes = [1, 128], strides = [1, 1]} : vector<16x128xf32> to vector<1x128xf32>
    %403 = vector.extract_strided_slice %8 {offsets = [15, 0], sizes = [1, 128], strides = [1, 1]} : vector<16x128xf32> to vector<1x128xf32>
    %404 = vector.broadcast %17 : vector<8x1xf32> to vector<8x128xf32>
    %405 = vector.broadcast %403 : vector<1x128xf32> to vector<8x128xf32>
    %406 = arith.mulf %404, %405 : vector<8x128xf32>
    %407 = vector.broadcast %402 : vector<1x128xf32> to vector<8x128xf32>
    %408 = arith.mulf %407, %374 : vector<8x128xf32>
    %c1_i32_61 = arith.constant 1 : i32
    %409 = tpu.dynamic_rotate %374 by %c1_i32_61 dim 0 : vector<8x128xf32>, i32 -> vector<8x128xf32>
    %c7_i32_62 = arith.constant 7 : i32
    %410 = tpu.dynamic_rotate %374 by %c7_i32_62 dim 0 : vector<8x128xf32>, i32 -> vector<8x128xf32>
    %411 = vector.shape_cast %57 : vector<8x1xi1> to vector<8x1xi1>
    %412 = vector.broadcast %411 : vector<8x1xi1> to vector<8x128xi1>
    %413 = arith.select %412, %409, %410 : vector<8x128xi1>, vector<8x128xf32>
    %414 = arith.mulf %406, %413 : vector<8x128xf32>
    %415 = arith.addf %408, %414 : vector<8x128xf32>
    %416 = vector.broadcast %402 : vector<1x128xf32> to vector<8x128xf32>
    %417 = arith.mulf %416, %383 : vector<8x128xf32>
    %c1_i32_63 = arith.constant 1 : i32
    %418 = tpu.dynamic_rotate %383 by %c1_i32_63 dim 0 : vector<8x128xf32>, i32 -> vector<8x128xf32>
    %c7_i32_64 = arith.constant 7 : i32
    %419 = tpu.dynamic_rotate %383 by %c7_i32_64 dim 0 : vector<8x128xf32>, i32 -> vector<8x128xf32>
    %420 = vector.shape_cast %57 : vector<8x1xi1> to vector<8x1xi1>
    %421 = vector.broadcast %420 : vector<8x1xi1> to vector<8x128xi1>
    %422 = arith.select %421, %418, %419 : vector<8x128xi1>, vector<8x128xf32>
    %423 = arith.mulf %406, %422 : vector<8x128xf32>
    %424 = arith.addf %417, %423 : vector<8x128xf32>
    %425 = vector.broadcast %402 : vector<1x128xf32> to vector<8x128xf32>
    %426 = arith.mulf %425, %392 : vector<8x128xf32>
    %c1_i32_65 = arith.constant 1 : i32
    %427 = tpu.dynamic_rotate %392 by %c1_i32_65 dim 0 : vector<8x128xf32>, i32 -> vector<8x128xf32>
    %c7_i32_66 = arith.constant 7 : i32
    %428 = tpu.dynamic_rotate %392 by %c7_i32_66 dim 0 : vector<8x128xf32>, i32 -> vector<8x128xf32>
    %429 = vector.shape_cast %57 : vector<8x1xi1> to vector<8x1xi1>
    %430 = vector.broadcast %429 : vector<8x1xi1> to vector<8x128xi1>
    %431 = arith.select %430, %427, %428 : vector<8x128xi1>, vector<8x128xf32>
    %432 = arith.mulf %406, %431 : vector<8x128xf32>
    %433 = arith.addf %426, %432 : vector<8x128xf32>
    %434 = vector.broadcast %402 : vector<1x128xf32> to vector<8x128xf32>
    %435 = arith.mulf %434, %401 : vector<8x128xf32>
    %c1_i32_67 = arith.constant 1 : i32
    %436 = tpu.dynamic_rotate %401 by %c1_i32_67 dim 0 : vector<8x128xf32>, i32 -> vector<8x128xf32>
    %c7_i32_68 = arith.constant 7 : i32
    %437 = tpu.dynamic_rotate %401 by %c7_i32_68 dim 0 : vector<8x128xf32>, i32 -> vector<8x128xf32>
    %438 = vector.shape_cast %57 : vector<8x1xi1> to vector<8x1xi1>
    %439 = vector.broadcast %438 : vector<8x1xi1> to vector<8x128xi1>
    %440 = arith.select %439, %436, %437 : vector<8x128xi1>, vector<8x128xf32>
    %441 = arith.mulf %406, %440 : vector<8x128xf32>
    %442 = arith.addf %435, %441 : vector<8x128xf32>
    %443 = tpu.concatenate %415, %433, %424, %442 in 0 : vector<8x128xf32>, vector<8x128xf32>, vector<8x128xf32>, vector<8x128xf32> -> vector<32x128xf32>
    %c0_69 = arith.constant 0 : index
    %c0_70 = arith.constant 0 : index
    %444 = vector.load %arg2[%c0_69, %c0_70] : memref<32x32xf32, #tpu.memory_space<vmem>>, vector<32x32xf32>
    %cst_71 = arith.constant dense<0.000000e+00> : vector<32x128xf32>
    %445 = tpu.matmul %444, %443, %cst_71 {dimension_numbers = #tpu.dot_dimension_numbers<[1], [0], [0], [1], [0, 0, 1, 1], [], []>} : vector<32x32xf32>, vector<32x128xf32>, vector<32x128xf32> -> vector<32x128xf32>
    %446 = vector.extract_strided_slice %445 {offsets = [0, 0], sizes = [16, 128], strides = [1, 1]} : vector<32x128xf32> to vector<16x128xf32>
    %447 = vector.extract_strided_slice %445 {offsets = [16, 0], sizes = [16, 128], strides = [1, 1]} : vector<32x128xf32> to vector<16x128xf32>
    %448 = arith.mulf %446, %446 : vector<16x128xf32>
    %449 = arith.mulf %447, %447 : vector<16x128xf32>
    %450 = arith.addf %448, %449 : vector<16x128xf32>
    %c0_72 = arith.constant 0 : index
    %c0_73 = arith.constant 0 : index
    %451 = vector.load %arg3[%c0_72, %c0_73] : memref<4x16xf32, #tpu.memory_space<vmem>>, vector<4x16xf32>
    %cst_74 = arith.constant dense<0.000000e+00> : vector<4x128xf32>
    %452 = tpu.matmul %451, %450, %cst_74 {dimension_numbers = #tpu.dot_dimension_numbers<[1], [0], [0], [1], [0, 0, 1, 1], [], []>} : vector<4x16xf32>, vector<16x128xf32>, vector<4x128xf32> -> vector<4x128xf32>
    %453 = vector.extract_strided_slice %452 {offsets = [0, 0], sizes = [1, 128], strides = [1, 1]} : vector<4x128xf32> to vector<1x128xf32>
    %454 = vector.extract_strided_slice %452 {offsets = [1, 0], sizes = [1, 128], strides = [1, 1]} : vector<4x128xf32> to vector<1x128xf32>
    %455 = vector.extract_strided_slice %452 {offsets = [2, 0], sizes = [1, 128], strides = [1, 1]} : vector<4x128xf32> to vector<1x128xf32>
    %456 = vector.extract_strided_slice %452 {offsets = [3, 0], sizes = [1, 128], strides = [1, 1]} : vector<4x128xf32> to vector<1x128xf32>
    %457 = arith.maximumf %453, %454 : vector<1x128xf32>
    %458 = arith.maximumf %455, %456 : vector<1x128xf32>
    %459 = arith.maximumf %457, %458 : vector<1x128xf32>
    %460 = arith.subf %453, %459 : vector<1x128xf32>
    %461 = math.exp %460 : vector<1x128xf32>
    %462 = arith.subf %454, %459 : vector<1x128xf32>
    %463 = math.exp %462 : vector<1x128xf32>
    %464 = arith.addf %461, %463 : vector<1x128xf32>
    %465 = arith.subf %455, %459 : vector<1x128xf32>
    %466 = math.exp %465 : vector<1x128xf32>
    %467 = arith.addf %464, %466 : vector<1x128xf32>
    %468 = arith.subf %456, %459 : vector<1x128xf32>
    %469 = math.exp %468 : vector<1x128xf32>
    %470 = arith.addf %467, %469 : vector<1x128xf32>
    %471 = math.log %470 : vector<1x128xf32>
    %472 = arith.addf %459, %471 : vector<1x128xf32>
    %473 = vector.broadcast %472 : vector<1x128xf32> to vector<4x128xf32>
    %474 = arith.subf %452, %473 : vector<4x128xf32>
    %c0_75 = arith.constant 0 : index
    %c0_76 = arith.constant 0 : index
    %475 = vector.load %arg5[%c0_75, %c0_76] : memref<4x128xf32, #tpu.memory_space<vmem>>, vector<4x128xf32>
    tpu.vector_store %arg5[%c0_75, %c0_76], %474 {strides = array<i32>} : memref<4x128xf32, #tpu.memory_space<vmem>>, vector<4x128xf32>,
    return
  }
  func.func @transform_0(%arg0: i32) -> (i32, i32) {
    %c0_i32 = arith.constant 0 : i32
    %c0_i32_0 = arith.constant 0 : i32
    %c0_i32_1 = arith.constant 0 : i32
    return %c0_i32, %c0_i32_0 : i32, i32
  }
  func.func @transform_1(%arg0: i32) -> (i32, i32) {
    %c0_i32 = arith.constant 0 : i32
    %c0_i32_0 = arith.constant 0 : i32
    %c0_i32_1 = arith.constant 0 : i32
    return %c0_i32, %c0_i32_0 : i32, i32
  }
  func.func @transform_2(%arg0: i32) -> (i32, i32) {
    %c0_i32 = arith.constant 0 : i32
    %c0_i32_0 = arith.constant 0 : i32
    %c0_i32_1 = arith.constant 0 : i32
    return %c0_i32, %c0_i32_0 : i32, i32
  }
  func.func @transform_3(%arg0: i32) -> (i32, i32) {
    %c0_i32 = arith.constant 0 : i32
    %c0_i32_0 = arith.constant 0 : i32
    return %arg0, %c0_i32 : i32, i32
  }
  func.func @transform_4(%arg0: i32) -> (i32, i32) {
    %c0_i32 = arith.constant 0 : i32
    %c0_i32_0 = arith.constant 0 : i32
    return %c0_i32, %arg0 : i32, i32
  }
}

</mosaic_0001>

<llo_original>
// kernel: tpu_custom_call.1
$region0: #{tpu_custom_call.1}
  #allocation0 [shape = 'u32[]', space=smem, size = 0x4, offset = 0x4, fixed_abs, tag = 'smem constant byte address 0x4 - core index']
  #allocation1 [shape = 'u32[144,128]{1,0:T(1,128)}', space=vmem, size = 0x12000, scoped, tag = 'internal scratch']
  %s0 = inlined_call_operand.vmem [shape: f32[16,784], index: 0, kind: input, shape index: {}]
  %s1 = inlined_call_operand.vmem [shape: f32[32,32], index: 1, kind: input, shape index: {}]
  %s2 = inlined_call_operand.vmem [shape: f32[4,16], index: 2, kind: input, shape index: {}]
  %s3 = inlined_call_operand.vmem [shape: f32[128,784], index: 3, kind: input, shape index: {}]
  %s4 = inlined_call_operand.hbm [shape: f32[4,128], index: 4, kind: output, shape index: {}]
  %s5 = sld [smem:[#allocation0]]
  $region26: #{tpu_custom_call.1} parent=0
    _
  %s7 = ssub.s32 1, %s5
  %s8 = scalar_select 0, %s7, %s5
  $region1: #{tpu_custom_call.1} parent=0
    #allocation2 [shape = 'u8[2048]{0}', space=vmem, size = 0x800, scoped, tag = 'output window, operand 0, single buffered']
    #allocation3 [shape = 's32[1]{0}', space=sflag, size = 0x4, scoped, tag = 'scoped memory for tpu_custom_call.1']
    %9 = vsyncpa [#allocation3], 0
    // Predicated region
    $region2: #{tpu_custom_call.1} parent=1 // pred_check
      _
    $region3: #{tpu_custom_call.1} parent=1 // pred_check_branch
      %11 = sbr.rel (0) target = $region5
    $region4: #{tpu_custom_call.1} parent=1 // pred_region
      _
    $region5: #{tpu_custom_call.1} parent=1 // pred_fallthru
      _
    // Predicated region
    $region6: #{tpu_custom_call.1} parent=1 // pred_check
      _
    $region7: #{tpu_custom_call.1} parent=1 // pred_check_branch
      %13 = sbr.rel (0) target = $region9
    $region8: #{tpu_custom_call.1} parent=1 // pred_region
      _
    $region9: #{tpu_custom_call.1} parent=1 // pred_fallthru
      _
    // Predicated region
    $region10: #{tpu_custom_call.1} parent=1 // pred_check
      _
    $region11: #{tpu_custom_call.1} parent=1 // pred_check_branch
      %15 = sbr.rel (0) target = $region13
    $region12: #{tpu_custom_call.1} parent=1 // pred_region
      _
    $region13: #{tpu_custom_call.1} parent=1 // pred_fallthru
      _
    // Predicated region
    $region14: #{tpu_custom_call.1} parent=1 // pred_check
      _
    $region15: #{tpu_custom_call.1} parent=1 // pred_check_branch
      %17 = sbr.rel (0) target = $region17
    $region16: #{tpu_custom_call.1} parent=1 // pred_region
      _
    $region17: #{tpu_custom_call.1} parent=1 // pred_fallthru
      _
    %v18 = vld [vmem:[%s0] sm:$0xff]
    %v19 = vld [vmem:[%s0 + $0x8] sm:$0xff]
    %v20 = vld [vmem:[%s0 + $0x10] sm:$0xff]
    %v21 = vld [vmem:[%s0 + $0x18] sm:$0xff]
    %v22 = vld [vmem:[%s0 + $0x20] sm:$0xff]
    %v23 = vld [vmem:[%s0 + $0x28] sm:$0xff]
    %v24 = vld [vmem:[%s0 + $0x30] sm:$0xff]
    %v25 = vld [vmem:[%s0 + $0x38] sm:$0xff]
    %v26 = vld [vmem:[%s0 + $0x40] sm:$0xff]
    %v27 = vld [vmem:[%s0 + $0x48] sm:$0xff]
    %v28 = vld [vmem:[%s0 + $0x50] sm:$0xff]
    %v29 = vld [vmem:[%s0 + $0x58] sm:$0xff]
    %v30 = vld [vmem:[%s0 + $0x60] sm:$0xff]
    %v31 = vld [vmem:[%s0 + $0x68] sm:$0xff]
    %v32 = vld [vmem:[%s3] sm:$0xff]
    %v33 = vld [vmem:[%s3 + $0x8] sm:$0xff]
    %v34 = vld [vmem:[%s3 + $0x10] sm:$0xff]
    %v35 = vld [vmem:[%s3 + $0x18] sm:$0xff]
    %v36 = vld [vmem:[%s3 + $0x20] sm:$0xff]
    %v37 = vld [vmem:[%s3 + $0x28] sm:$0xff]
    %v38 = vld [vmem:[%s3 + $0x30] sm:$0xff]
    %v39 = vld [vmem:[%s3 + $0x38] sm:$0xff]
    %v40 = vld [vmem:[%s3 + $0x40] sm:$0xff]
    %v41 = vld [vmem:[%s3 + $0x48] sm:$0xff]
    %v42 = vld [vmem:[%s3 + $0x50] sm:$0xff]
    %v43 = vld [vmem:[%s3 + $0x58] sm:$0xff]
    %v44 = vld [vmem:[%s3 + $0x60] sm:$0xff]
    %v45 = vld [vmem:[%s3 + $0x68] sm:$0xff]
    %v46 = vld [vmem:[%s3 + $0x70] sm:$0xff]
    %v47 = vld [vmem:[%s3 + $0x78] sm:$0xff]
    %v48 = vld [vmem:[%s3 + $0x80] sm:$0xff]
    %v49 = vld [vmem:[%s3 + $0x88] sm:$0xff]
    %v50 = vld [vmem:[%s3 + $0x90] sm:$0xff]
    %v51 = vld [vmem:[%s3 + $0x98] sm:$0xff]
    %v52 = vld [vmem:[%s3 + $0xa0] sm:$0xff]
    %v53 = vld [vmem:[%s3 + $0xa8] sm:$0xff]
    %v54 = vld [vmem:[%s3 + $0xb0] sm:$0xff]
    %v55 = vld [vmem:[%s3 + $0xb8] sm:$0xff]
    %v56 = vld [vmem:[%s3 + $0xc0] sm:$0xff]
    %v57 = vld [vmem:[%s3 + $0xc8] sm:$0xff]
    %v58 = vld [vmem:[%s3 + $0xd0] sm:$0xff]
    %v59 = vld [vmem:[%s3 + $0xd8] sm:$0xff]
    %v60 = vld [vmem:[%s3 + $0xe0] sm:$0xff]
    %v61 = vld [vmem:[%s3 + $0xe8] sm:$0xff]
    %v62 = vld [vmem:[%s3 + $0xf0] sm:$0xff]
    %v63 = vld [vmem:[%s3 + $0xf8] sm:$0xff]
    %v64 = vld [vmem:[%s3 + $0x100] sm:$0xff]
    %v65 = vld [vmem:[%s3 + $0x108] sm:$0xff]
    %v66 = vld [vmem:[%s3 + $0x110] sm:$0xff]
    %v67 = vld [vmem:[%s3 + $0x118] sm:$0xff]
    %v68 = vld [vmem:[%s3 + $0x120] sm:$0xff]
    %v69 = vld [vmem:[%s3 + $0x128] sm:$0xff]
    %v70 = vld [vmem:[%s3 + $0x130] sm:$0xff]
    %v71 = vld [vmem:[%s3 + $0x138] sm:$0xff]
    %v72 = vld [vmem:[%s3 + $0x140] sm:$0xff]
    %v73 = vld [vmem:[%s3 + $0x148] sm:$0xff]
    %v74 = vld [vmem:[%s3 + $0x150] sm:$0xff]
    %v75 = vld [vmem:[%s3 + $0x158] sm:$0xff]
    %v76 = vld [vmem:[%s3 + $0x160] sm:$0xff]
    %v77 = vld [vmem:[%s3 + $0x168] sm:$0xff]
    %v78 = vld [vmem:[%s3 + $0x170] sm:$0xff]
    %v79 = vld [vmem:[%s3 + $0x178] sm:$0xff]
    %v80 = vld [vmem:[%s3 + $0x180] sm:$0xff]
    %v81 = vld [vmem:[%s3 + $0x188] sm:$0xff]
    %v82 = vld [vmem:[%s3 + $0x190] sm:$0xff]
    %v83 = vld [vmem:[%s3 + $0x198] sm:$0xff]
    %v84 = vld [vmem:[%s3 + $0x1a0] sm:$0xff]
    %v85 = vld [vmem:[%s3 + $0x1a8] sm:$0xff]
    %v86 = vld [vmem:[%s3 + $0x1b0] sm:$0xff]
    %v87 = vld [vmem:[%s3 + $0x1b8] sm:$0xff]
    %v88 = vld [vmem:[%s3 + $0x1c0] sm:$0xff]
    %v89 = vld [vmem:[%s3 + $0x1c8] sm:$0xff]
    %v90 = vld [vmem:[%s3 + $0x1d0] sm:$0xff]
    %v91 = vld [vmem:[%s3 + $0x1d8] sm:$0xff]
    %v92 = vld [vmem:[%s3 + $0x1e0] sm:$0xff]
    %v93 = vld [vmem:[%s3 + $0x1e8] sm:$0xff]
    %v94 = vld [vmem:[%s3 + $0x1f0] sm:$0xff]
    %v95 = vld [vmem:[%s3 + $0x1f8] sm:$0xff]
    %v96 = vld [vmem:[%s3 + $0x200] sm:$0xff]
    %v97 = vld [vmem:[%s3 + $0x208] sm:$0xff]
    %v98 = vld [vmem:[%s3 + $0x210] sm:$0xff]
    %v99 = vld [vmem:[%s3 + $0x218] sm:$0xff]
    %v100 = vld [vmem:[%s3 + $0x220] sm:$0xff]
    %v101 = vld [vmem:[%s3 + $0x228] sm:$0xff]
    %v102 = vld [vmem:[%s3 + $0x230] sm:$0xff]
    %v103 = vld [vmem:[%s3 + $0x238] sm:$0xff]
    %v104 = vld [vmem:[%s3 + $0x240] sm:$0xff]
    %v105 = vld [vmem:[%s3 + $0x248] sm:$0xff]
    %v106 = vld [vmem:[%s3 + $0x250] sm:$0xff]
    %v107 = vld [vmem:[%s3 + $0x258] sm:$0xff]
    %v108 = vld [vmem:[%s3 + $0x260] sm:$0xff]
    %v109 = vld [vmem:[%s3 + $0x268] sm:$0xff]
    %v110 = vld [vmem:[%s3 + $0x270] sm:$0xff]
    %v111 = vld [vmem:[%s3 + $0x278] sm:$0xff]
    %v112 = vld [vmem:[%s3 + $0x280] sm:$0xff]
    %v113 = vld [vmem:[%s3 + $0x288] sm:$0xff]
    %v114 = vld [vmem:[%s3 + $0x290] sm:$0xff]
    %v115 = vld [vmem:[%s3 + $0x298] sm:$0xff]
    %v116 = vld [vmem:[%s3 + $0x2a0] sm:$0xff]
    %v117 = vld [vmem:[%s3 + $0x2a8] sm:$0xff]
    %v118 = vld [vmem:[%s3 + $0x2b0] sm:$0xff]
    %v119 = vld [vmem:[%s3 + $0x2b8] sm:$0xff]
    %v120 = vld [vmem:[%s3 + $0x2c0] sm:$0xff]
    %v121 = vld [vmem:[%s3 + $0x2c8] sm:$0xff]
    %v122 = vld [vmem:[%s3 + $0x2d0] sm:$0xff]
    %v123 = vld [vmem:[%s3 + $0x2d8] sm:$0xff]
    %v124 = vld [vmem:[%s3 + $0x2e0] sm:$0xff]
    %v125 = vld [vmem:[%s3 + $0x2e8] sm:$0xff]
    %v126 = vld [vmem:[%s3 + $0x2f0] sm:$0xff]
    %v127 = vld [vmem:[%s3 + $0x2f8] sm:$0xff]
    %v128 = vld [vmem:[%s3 + $0x300] sm:$0xff]
    %v129 = vld [vmem:[%s3 + $0x308] sm:$0xff]
    %v130 = vld [vmem:[%s3 + $0x310] sm:$0xff]
    %v131 = vld [vmem:[%s3 + $0x318] sm:$0xff]
    %v132 = vld [vmem:[%s3 + $0x320] sm:$0xff]
    %v133 = vld [vmem:[%s3 + $0x328] sm:$0xff]
    %v134 = vld [vmem:[%s3 + $0x330] sm:$0xff]
    %v135 = vld [vmem:[%s3 + $0x338] sm:$0xff]
    %v136 = vld [vmem:[%s3 + $0x340] sm:$0xff]
    %v137 = vld [vmem:[%s3 + $0x348] sm:$0xff]
    %v138 = vld [vmem:[%s3 + $0x350] sm:$0xff]
    %v139 = vld [vmem:[%s3 + $0x358] sm:$0xff]
    %v140 = vld [vmem:[%s3 + $0x360] sm:$0xff]
    %v141 = vld [vmem:[%s3 + $0x368] sm:$0xff]
    %v142 = vld [vmem:[%s3 + $0x370] sm:$0xff]
    %v143 = vld [vmem:[%s3 + $0x378] sm:$0xff]
    %vm144 = vcmask 130048
    %v146 = vsel %vm144, %v24, 0
    %v149 = vsel %vm144, %v31, 0
    %v152 = vsel %vm144, %v38, 0
    %v155 = vsel %vm144, %v45, 0
    %v158 = vsel %vm144, %v52, 0
    %v161 = vsel %vm144, %v59, 0
    %v164 = vsel %vm144, %v66, 0
    %v167 = vsel %vm144, %v73, 0
    %v170 = vsel %vm144, %v80, 0
    %v173 = vsel %vm144, %v87, 0
    %v176 = vsel %vm144, %v94, 0
    %v179 = vsel %vm144, %v101, 0
    %v182 = vsel %vm144, %v108, 0
    %v185 = vsel %vm144, %v115, 0
    %v188 = vsel %vm144, %v122, 0
    %v191 = vsel %vm144, %v129, 0
    %v194 = vsel %vm144, %v136, 0
    %v197 = vsel %vm144, %v143, 0
    %199 = vmatprep.subr.mxu0 %v33
    %200 = vmatpush1.xpose.msra.mxu0 %v32
    %201 = vmatprep.subr.mxu0 %v40
    %202 = vmatpush1.xpose.msra.mxu0 %v39
    %203 = vmatprep.subr.mxu0 %v47
    %204 = vmatpush1.xpose.msra.mxu0 %v46
    %205 = vmatprep.subr.mxu0 %v54
    %206 = vmatpush1.xpose.msra.mxu0 %v53
    %207 = vmatprep.subr.mxu0 %v61
    %208 = vmatpush1.xpose.msra.mxu0 %v60
    %209 = vmatprep.subr.mxu0 %v68
    %210 = vmatpush1.xpose.msra.mxu0 %v67
    %211 = vmatprep.subr.mxu0 %v75
    %212 = vmatpush1.xpose.msra.mxu0 %v74
    %213 = vmatprep.subr.mxu0 %v82
    %214 = vmatpush1.xpose.msra.mxu0 %v81
    %215 = vmatprep.subr.mxu0 %v89
    %216 = vmatpush1.xpose.msra.mxu0 %v88
    %217 = vmatprep.subr.mxu0 %v96
    %218 = vmatpush1.xpose.msra.mxu0 %v95
    %219 = vmatprep.subr.mxu0 %v103
    %220 = vmatpush1.xpose.msra.mxu0 %v102
    %221 = vmatprep.subr.mxu0 %v110
    %222 = vmatpush1.xpose.msra.mxu0 %v109
    %223 = vmatprep.subr.mxu0 %v117
    %224 = vmatpush1.xpose.msra.mxu0 %v116
    %225 = vmatprep.subr.mxu0 %v124
    %226 = vmatpush1.xpose.msra.mxu0 %v123
    %227 = vmatprep.subr.mxu0 %v131
    %228 = vmatpush1.xpose.msra.mxu0 %v130
    %229 = vmatprep.subr.mxu0 %v138
    %230 = vmatpush1.xpose.msra.mxu0 %v137
    %231 = vmatprep.subr.mxu0 0.0
    %232 = vmatpush1.xpose.msra.mxu0 0.0
    %233 = vmatprep.subr.mxu0 0.0
    %234 = vmatpush1.xpose.msra.mxu0 0.0
    %235 = vmatprep.subr.mxu0 0.0
    %236 = vmatpush1.xpose.msra.mxu0 0.0
    %237 = vmatprep.subr.mxu0 0.0
    %238 = vmatpush1.xpose.msra.mxu0 0.0
    %239 = vmatprep.subr.mxu0 0.0
    %240 = vmatpush1.xpose.msra.mxu0 0.0
    %241 = vmatprep.subr.mxu0 0.0
    %242 = vmatpush1.xpose.msra.mxu0 0.0
    %243 = vmatprep.subr.mxu0 0.0
    %244 = vmatpush1.xpose.msra.mxu0 0.0
    %245 = vmatprep.subr.mxu0 0.0
    %246 = vmatpush1.xpose.msra.mxu0 0.0
    %247 = vmatprep.subr.mxu0 0.0
    %248 = vmatpush1.xpose.msra.mxu0 0.0
    %249 = vmatprep.subr.mxu0 0.0
    %250 = vmatpush1.xpose.msra.mxu0 0.0
    %251 = vmatprep.subr.mxu0 0.0
    %252 = vmatpush1.xpose.msra.mxu0 0.0
    %253 = vmatprep.subr.mxu0 0.0
    %254 = vmatpush1.xpose.msra.mxu0 0.0
    %255 = vmatprep.subr.mxu0 0.0
    %256 = vmatpush1.xpose.msra.mxu0 0.0
    %257 = vmatprep.subr.mxu0 0.0
    %258 = vmatpush1.xpose.msra.mxu0 0.0
    %259 = vmatprep.subr.mxu0 0.0
    %260 = vmatpush1.xpose.msra.mxu0 0.0
    %261 = vmatprep.subr.mxu0 0.0
    %262 = vmatpush1.xpose.msra.mxu0 0.0
    %263 = vmatprep.mubr.f32.mxu0 %v19
    %264 = vmatmul.mubr.f32.gmra.mrb[0].mxu0 %v18
    %v265 = vpop.f32.mrb[0].mxu0
    %v266 = vadd.f32 0.0, %v265
    %v267 = vpop.f32.mrb[0].mxu0
    %268 = vmatprep.mubr.f32.mxu0 %v26
    %269 = vmatmul.mubr.f32.gmra.mrb[0].mxu0 %v25
    %v270 = vpop.f32.mrb[0].mxu0
    %v271 = vadd.f32 0.0, %v270
    %v272 = vpop.f32.mrb[0].mxu0
    %273 = vdwg.mxu0
    %274 = vmatprep.subr.mxu0 %v35
    %275 = vmatpush1.xpose.msra.mxu0 %v34
    %276 = vmatprep.subr.mxu0 %v42
    %277 = vmatpush1.xpose.msra.mxu0 %v41
    %278 = vmatprep.subr.mxu0 %v49
    %279 = vmatpush1.xpose.msra.mxu0 %v48
    %280 = vmatprep.subr.mxu0 %v56
    %281 = vmatpush1.xpose.msra.mxu0 %v55
    %282 = vmatprep.subr.mxu0 %v63
    %283 = vmatpush1.xpose.msra.mxu0 %v62
    %284 = vmatprep.subr.mxu0 %v70
    %285 = vmatpush1.xpose.msra.mxu0 %v69
    %286 = vmatprep.subr.mxu0 %v77
    %287 = vmatpush1.xpose.msra.mxu0 %v76
    %288 = vmatprep.subr.mxu0 %v84
    %289 = vmatpush1.xpose.msra.mxu0 %v83
    %290 = vmatprep.subr.mxu0 %v91
    %291 = vmatpush1.xpose.msra.mxu0 %v90
    %292 = vmatprep.subr.mxu0 %v98
    %293 = vmatpush1.xpose.msra.mxu0 %v97
    %294 = vmatprep.subr.mxu0 %v105
    %295 = vmatpush1.xpose.msra.mxu0 %v104
    %296 = vmatprep.subr.mxu0 %v112
    %297 = vmatpush1.xpose.msra.mxu0 %v111
    %298 = vmatprep.subr.mxu0 %v119
    %299 = vmatpush1.xpose.msra.mxu0 %v118
    %300 = vmatprep.subr.mxu0 %v126
    %301 = vmatpush1.xpose.msra.mxu0 %v125
    %302 = vmatprep.subr.mxu0 %v133
    %303 = vmatpush1.xpose.msra.mxu0 %v132
    %304 = vmatprep.subr.mxu0 %v140
    %305 = vmatpush1.xpose.msra.mxu0 %v139
    %306 = vmatprep.subr.mxu0 0.0
    %307 = vmatpush1.xpose.msra.mxu0 0.0
    %308 = vmatprep.subr.mxu0 0.0
    %309 = vmatpush1.xpose.msra.mxu0 0.0
    %310 = vmatprep.subr.mxu0 0.0
    %311 = vmatpush1.xpose.msra.mxu0 0.0
    %312 = vmatprep.subr.mxu0 0.0
    %313 = vmatpush1.xpose.msra.mxu0 0.0
    %314 = vmatprep.subr.mxu0 0.0
    %315 = vmatpush1.xpose.msra.mxu0 0.0
    %316 = vmatprep.subr.mxu0 0.0
    %317 = vmatpush1.xpose.msra.mxu0 0.0
    %318 = vmatprep.subr.mxu0 0.0
    %319 = vmatpush1.xpose.msra.mxu0 0.0
    %320 = vmatprep.subr.mxu0 0.0
    %321 = vmatpush1.xpose.msra.mxu0 0.0
    %322 = vmatprep.subr.mxu0 0.0
    %323 = vmatpush1.xpose.msra.mxu0 0.0
    %324 = vmatprep.subr.mxu0 0.0
    %325 = vmatpush1.xpose.msra.mxu0 0.0
    %326 = vmatprep.subr.mxu0 0.0
    %327 = vmatpush1.xpose.msra.mxu0 0.0
    %328 = vmatprep.subr.mxu0 0.0
    %329 = vmatpush1.xpose.msra.mxu0 0.0
    %330 = vmatprep.subr.mxu0 0.0
    %331 = vmatpush1.xpose.msra.mxu0 0.0
    %332 = vmatprep.subr.mxu0 0.0
    %333 = vmatpush1.xpose.msra.mxu0 0.0
    %334 = vmatprep.subr.mxu0 0.0
    %335 = vmatpush1.xpose.msra.mxu0 0.0
    %336 = vmatprep.subr.mxu0 0.0
    %337 = vmatpush1.xpose.msra.mxu0 0.0
    %338 = vmatprep.mubr.f32.mxu0 %v21
    %339 = vmatmul.mubr.f32.gmra.mrb[0].mxu0 %v20
    %v340 = vpop.f32.mrb[0].mxu0
    %v341 = vadd.f32 %v266, %v340
    %v342 = vpop.f32.mrb[0].mxu0
    %343 = vmatprep.mubr.f32.mxu0 %v28
    %344 = vmatmul.mubr.f32.gmra.mrb[0].mxu0 %v27
    %v345 = vpop.f32.mrb[0].mxu0
    %v346 = vadd.f32 %v271, %v345
    %v347 = vpop.f32.mrb[0].mxu0
    %348 = vdwg.mxu0
    %349 = vmatprep.subr.mxu0 %v37
    %350 = vmatpush1.xpose.msra.mxu0 %v36
    %351 = vmatprep.subr.mxu0 %v44
    %352 = vmatpush1.xpose.msra.mxu0 %v43
    %353 = vmatprep.subr.mxu0 %v51
    %354 = vmatpush1.xpose.msra.mxu0 %v50
    %355 = vmatprep.subr.mxu0 %v58
    %356 = vmatpush1.xpose.msra.mxu0 %v57
    %357 = vmatprep.subr.mxu0 %v65
    %358 = vmatpush1.xpose.msra.mxu0 %v64
    %359 = vmatprep.subr.mxu0 %v72
    %360 = vmatpush1.xpose.msra.mxu0 %v71
    %361 = vmatprep.subr.mxu0 %v79
    %362 = vmatpush1.xpose.msra.mxu0 %v78
    %363 = vmatprep.subr.mxu0 %v86
    %364 = vmatpush1.xpose.msra.mxu0 %v85
    %365 = vmatprep.subr.mxu0 %v93
    %366 = vmatpush1.xpose.msra.mxu0 %v92
    %367 = vmatprep.subr.mxu0 %v100
    %368 = vmatpush1.xpose.msra.mxu0 %v99
    %369 = vmatprep.subr.mxu0 %v107
    %370 = vmatpush1.xpose.msra.mxu0 %v106
    %371 = vmatprep.subr.mxu0 %v114
    %372 = vmatpush1.xpose.msra.mxu0 %v113
    %373 = vmatprep.subr.mxu0 %v121
    %374 = vmatpush1.xpose.msra.mxu0 %v120
    %375 = vmatprep.subr.mxu0 %v128
    %376 = vmatpush1.xpose.msra.mxu0 %v127
    %377 = vmatprep.subr.mxu0 %v135
    %378 = vmatpush1.xpose.msra.mxu0 %v134
    %379 = vmatprep.subr.mxu0 %v142
    %380 = vmatpush1.xpose.msra.mxu0 %v141
    %381 = vmatprep.subr.mxu0 0.0
    %382 = vmatpush1.xpose.msra.mxu0 0.0
    %383 = vmatprep.subr.mxu0 0.0
    %384 = vmatpush1.xpose.msra.mxu0 0.0
    %385 = vmatprep.subr.mxu0 0.0
    %386 = vmatpush1.xpose.msra.mxu0 0.0
    %387 = vmatprep.subr.mxu0 0.0
    %388 = vmatpush1.xpose.msra.mxu0 0.0
    %389 = vmatprep.subr.mxu0 0.0
    %390 = vmatpush1.xpose.msra.mxu0 0.0
    %391 = vmatprep.subr.mxu0 0.0
    %392 = vmatpush1.xpose.msra.mxu0 0.0
    %393 = vmatprep.subr.mxu0 0.0
    %394 = vmatpush1.xpose.msra.mxu0 0.0
    %395 = vmatprep.subr.mxu0 0.0
    %396 = vmatpush1.xpose.msra.mxu0 0.0
    %397 = vmatprep.subr.mxu0 0.0
    %398 = vmatpush1.xpose.msra.mxu0 0.0
    %399 = vmatprep.subr.mxu0 0.0
    %400 = vmatpush1.xpose.msra.mxu0 0.0
    %401 = vmatprep.subr.mxu0 0.0
    %402 = vmatpush1.xpose.msra.mxu0 0.0
    %403 = vmatprep.subr.mxu0 0.0
    %404 = vmatpush1.xpose.msra.mxu0 0.0
    %405 = vmatprep.subr.mxu0 0.0
    %406 = vmatpush1.xpose.msra.mxu0 0.0
    %407 = vmatprep.subr.mxu0 0.0
    %408 = vmatpush1.xpose.msra.mxu0 0.0
    %409 = vmatprep.subr.mxu0 0.0
    %410 = vmatpush1.xpose.msra.mxu0 0.0
    %411 = vmatprep.subr.mxu0 0.0
    %412 = vmatpush1.xpose.msra.mxu0 0.0
    %413 = vmatprep.mubr.f32.mxu0 %v23
    %414 = vmatmul.mubr.f32.gmra.mrb[0].mxu0 %v22
    %v415 = vpop.f32.mrb[0].mxu0
    %v416 = vadd.f32 %v341, %v415
    %v417 = vpop.f32.mrb[0].mxu0
    %418 = vmatprep.mubr.f32.mxu0 %v30
    %419 = vmatmul.mubr.f32.gmra.mrb[0].mxu0 %v29
    %v420 = vpop.f32.mrb[0].mxu0
    %v421 = vadd.f32 %v346, %v420
    %v422 = vpop.f32.mrb[0].mxu0
    %423 = vdwg.mxu0
    %424 = vmatprep.subr.mxu0 0.0
    %425 = vmatpush1.xpose.msra.mxu0 %v152
    %426 = vmatprep.subr.mxu0 0.0
    %427 = vmatpush1.xpose.msra.mxu0 %v155
    %428 = vmatprep.subr.mxu0 0.0
    %429 = vmatpush1.xpose.msra.mxu0 %v158
    %430 = vmatprep.subr.mxu0 0.0
    %431 = vmatpush1.xpose.msra.mxu0 %v161
    %432 = vmatprep.subr.mxu0 0.0
    %433 = vmatpush1.xpose.msra.mxu0 %v164
    %434 = vmatprep.subr.mxu0 0.0
    %435 = vmatpush1.xpose.msra.mxu0 %v167
    %436 = vmatprep.subr.mxu0 0.0
    %437 = vmatpush1.xpose.msra.mxu0 %v170
    %438 = vmatprep.subr.mxu0 0.0
    %439 = vmatpush1.xpose.msra.mxu0 %v173
    %440 = vmatprep.subr.mxu0 0.0
    %441 = vmatpush1.xpose.msra.mxu0 %v176
    %442 = vmatprep.subr.mxu0 0.0
    %443 = vmatpush1.xpose.msra.mxu0 %v179
    %444 = vmatprep.subr.mxu0 0.0
    %445 = vmatpush1.xpose.msra.mxu0 %v182
    %446 = vmatprep.subr.mxu0 0.0
    %447 = vmatpush1.xpose.msra.mxu0 %v185
    %448 = vmatprep.subr.mxu0 0.0
    %449 = vmatpush1.xpose.msra.mxu0 %v188
    %450 = vmatprep.subr.mxu0 0.0
    %451 = vmatpush1.xpose.msra.mxu0 %v191
    %452 = vmatprep.subr.mxu0 0.0
    %453 = vmatpush1.xpose.msra.mxu0 %v194
    %454 = vmatprep.subr.mxu0 0.0
    %455 = vmatpush1.xpose.msra.mxu0 %v197
    %456 = vmatprep.subr.mxu0 0.0
    %457 = vmatpush1.xpose.msra.mxu0 0.0
    %458 = vmatprep.subr.mxu0 0.0
    %459 = vmatpush1.xpose.msra.mxu0 0.0
    %460 = vmatprep.subr.mxu0 0.0
    %461 = vmatpush1.xpose.msra.mxu0 0.0
    %462 = vmatprep.subr.mxu0 0.0
    %463 = vmatpush1.xpose.msra.mxu0 0.0
    %464 = vmatprep.subr.mxu0 0.0
    %465 = vmatpush1.xpose.msra.mxu0 0.0
    %466 = vmatprep.subr.mxu0 0.0
    %467 = vmatpush1.xpose.msra.mxu0 0.0
    %468 = vmatprep.subr.mxu0 0.0
    %469 = vmatpush1.xpose.msra.mxu0 0.0
    %470 = vmatprep.subr.mxu0 0.0
    %471 = vmatpush1.xpose.msra.mxu0 0.0
    %472 = vmatprep.subr.mxu0 0.0
    %473 = vmatpush1.xpose.msra.mxu0 0.0
    %474 = vmatprep.subr.mxu0 0.0
    %475 = vmatpush1.xpose.msra.mxu0 0.0
    %476 = vmatprep.subr.mxu0 0.0
    %477 = vmatpush1.xpose.msra.mxu0 0.0
    %478 = vmatprep.subr.mxu0 0.0
    %479 = vmatpush1.xpose.msra.mxu0 0.0
    %480 = vmatprep.subr.mxu0 0.0
    %481 = vmatpush1.xpose.msra.mxu0 0.0
    %482 = vmatprep.subr.mxu0 0.0
    %483 = vmatpush1.xpose.msra.mxu0 0.0
    %484 = vmatprep.subr.mxu0 0.0
    %485 = vmatpush1.xpose.msra.mxu0 0.0
    %486 = vmatprep.subr.mxu0 0.0
    %487 = vmatpush1.xpose.msra.mxu0 0.0
    %488 = vmatprep.mubr.f32.mxu0 0.0
    %489 = vmatmul.mubr.f32.gmra.mrb[0].mxu0 %v146
    %v490 = vpop.f32.mrb[0].mxu0
    %v491 = vadd.f32 %v416, %v490
    %v492 = vpop.f32.mrb[0].mxu0
    %493 = vmatprep.mubr.f32.mxu0 0.0
    %494 = vmatmul.mubr.f32.gmra.mrb[0].mxu0 %v149
    %v495 = vpop.f32.mrb[0].mxu0
    %v496 = vadd.f32 %v421, %v495
    %v497 = vpop.f32.mrb[0].mxu0
    %498 = vdwg.mxu0
    %v499 = vmul.f32 %v491, 0.5
    %v500 = vmul.f32 %v496, 0.5
    %v501 = vand.u32 2147483647, %v499
    %vm502 = vcmp.le.f32.partialorder %v501, 0.7853982
    %vm503 = vcmp.lt.s32.totalorder %v499, 0
    %v504 = vand.u32 %v499, 2139095040
    %v505 = vshrl.u32 %v504, 23
    %v506 = vsub.s32 %v505, 127
    %v507 = vand.u32 2147483647, %v499
    %v508 = vand.u32 %v507, 8388607
    %v509 = vor.u32 %v508, 8388608
    %v510 = vsub.s32 0, %v509
    %v511 = vadd.s32 %v506, 1
    %vm512 = vcmp.gt.s32.totalorder %v511, 0
    %v513 = vsel %vm512, %v511, 0
    %v514 = vshrl.u32 %v513, 5
    %v515 = vand.u32 %v513, 31
    %v516 = vsub.s32 32, %v515
    %v517 = vshrl.u32 683565275, %v516
    %v518 = vshll.u32 683565275, %v515
    %v519 = vshrl.u32 2475754826, %v516
    %v520 = vor.u32 %v518, %v519
    %v521 = vshll.u32 2475754826, %v515
    %v522 = vshrl.u32 2131351028, %v516
    %v523 = vor.u32 %v521, %v522
    %v524 = vshll.u32 2131351028, %v515
    %v525 = vshrl.u32 2102212464, %v516
    %v526 = vor.u32 %v524, %v525
    %v527 = vshll.u32 2102212464, %v515
    %v528 = vshrl.u32 920167782, %v516
    %v529 = vor.u32 %v527, %v528
    %v530 = vshll.u32 920167782, %v515
    %v531 = vshrl.u32 1326507024, %v516
    %v532 = vor.u32 %v530, %v531
    %vm533 = vcmp.lt.s32.totalorder %v514, 1
    %vm534 = vcmp.lt.s32.totalorder %v514, 2
    %vm535 = vcmp.lt.s32.totalorder %v514, 3
    %vm536 = vcmp.lt.s32.totalorder %v514, 4
    %v537 = vsel %vm533, %v517, %v520
    %v538 = vsel %vm536, %v526, 2102212464
    %v539 = vsel %vm535, %v523, %v538
    %v540 = vsel %vm534, %v537, %v539
    %v541 = vsel %vm533, %v520, %v523
    %v542 = vsel %vm536, %v529, 920167782
    %v543 = vsel %vm535, %v526, %v542
    %v544 = vsel %vm534, %v541, %v543
    %v545 = vsel %vm533, %v523, %v526
    %v546 = vsel %vm536, %v532, 1326507024
    %v547 = vsel %vm535, %v529, %v546
    %v548 = vsel %vm534, %v545, %v547
    %v549 = vshll.u32 %v509, 8
    %v550 = vmul.u32.u64.compose %v549, %v548
    %v551 = vextract.low.u32 %v550
    %v552 = vextract.high.u32 %v550
    %v553 = vmul.u32.u64.compose %v549, %v544
    %v554 = vextract.low.u32 %v553
    %v555 = vextract.high.u32 %v553
    %v556 = vmul.u32 %v549, %v540
    %v557 = vadd.s32 %v552, %v554
    %vm558 = vc.u32 %v552, %v554
    %v559 = vadd.s32 %v555, 1
    %v560 = vsel %vm558, %v559, %v555
    %v561 = vadd.s32 %v556, %v560
    %v562 = vadd.s32 %v561, 536870912
    %v563 = vshrl.u32 %v562, 30
    %v564 = vshll.u32 %v563, 30
    %v565 = vsub.s32 %v561, %v564
    %vm566 = vcmp.lt.s32.totalorder %v565, 0
    %v567 = vsub.s32 0, %v565
    %v568 = vsel %vm566, %v567, %v565
    %v569 = vclz %v568
    %v570 = vsub.s32 %v569, 2
    %vm571 = vcmp.gt.s32.totalorder 0, %v570
    %v572 = vsel %vm571, 0, %v570
    %v573 = vsub.s32 32, %v572
    %v574 = vshll.u32 %v565, %v572
    %v575 = vshrl.u32 %v557, %v573
    %v576 = vor.u32 %v574, %v575
    %v577 = vsub.s32 4294967266, %v572
    %v578 = vadd.s32 %v577, 127
    %v579 = vshll.u32 %v578, 23
    %v580 = vor.u32 4788187, %v579
    %v581 = vand.u32 2147483647, %v580
    %v583 = vcvt.s32.f32 %v576
    %v584 = vmul.f32 %v583, %v581
    %v585 = vxor.u32 %v584, 2147483648
    %v586 = vsel %vm503, %v585, %v584
    %v587 = vsub.s32 4, %v563
    %v588 = vsel %vm503, %v587, %v563
    %v589 = vsel %vm502, %v499, %v586
    %v590 = vsel %vm502, 0, %v588
    %v591 = vcosq.f32.pop %v589
    %v592 = vsinq.f32.pop %v589
    %vm593 = vweird.f32 %v499
    %v594 = vand.u32 %v590, 3
    %vm595 = vcmp.lt.s32.totalorder %v594, 2
    %vm596 = vcmp.eq.s32.totalorder %v594, 0
    %v597 = vxor.u32 %v592, 2147483648
    %v598 = vsel %vm596, %v591, %v597
    %vm599 = vcmp.eq.s32.totalorder %v594, 2
    %v600 = vxor.u32 %v591, 2147483648
    %v601 = vsel %vm599, %v600, %v592
    %v602 = vsel %vm595, %v598, %v601
    %v603 = vsel %vm593, nan, %v602
    %v604 = vand.u32 2147483647, %v500
    %vm605 = vcmp.le.f32.partialorder %v604, 0.7853982
    %vm606 = vcmp.lt.s32.totalorder %v500, 0
    %v607 = vand.u32 %v500, 2139095040
    %v608 = vshrl.u32 %v607, 23
    %v609 = vsub.s32 %v608, 127
    %v610 = vand.u32 2147483647, %v500
    %v611 = vand.u32 %v610, 8388607
    %v612 = vor.u32 %v611, 8388608
    %v613 = vsub.s32 0, %v612
    %v614 = vadd.s32 %v609, 1
    %vm615 = vcmp.gt.s32.totalorder %v614, 0
    %v616 = vsel %vm615, %v614, 0
    %v617 = vshrl.u32 %v616, 5
    %v618 = vand.u32 %v616, 31
    %v619 = vsub.s32 32, %v618
    %v620 = vshrl.u32 683565275, %v619
    %v621 = vshll.u32 683565275, %v618
    %v622 = vshrl.u32 2475754826, %v619
    %v623 = vor.u32 %v621, %v622
    %v624 = vshll.u32 2475754826, %v618
    %v625 = vshrl.u32 2131351028, %v619
    %v626 = vor.u32 %v624, %v625
    %v627 = vshll.u32 2131351028, %v618
    %v628 = vshrl.u32 2102212464, %v619
    %v629 = vor.u32 %v627, %v628
    %v630 = vshll.u32 2102212464, %v618
    %v631 = vshrl.u32 920167782, %v619
    %v632 = vor.u32 %v630, %v631
    %v633 = vshll.u32 920167782, %v618
    %v634 = vshrl.u32 1326507024, %v619
    %v635 = vor.u32 %v633, %v634
    %vm636 = vcmp.lt.s32.totalorder %v617, 1
    %vm637 = vcmp.lt.s32.totalorder %v617, 2
    %vm638 = vcmp.lt.s32.totalorder %v617, 3
    %vm639 = vcmp.lt.s32.totalorder %v617, 4
    %v640 = vsel %vm636, %v620, %v623
    %v641 = vsel %vm639, %v629, 2102212464
    %v642 = vsel %vm638, %v626, %v641
    %v643 = vsel %vm637, %v640, %v642
    %v644 = vsel %vm636, %v623, %v626
    %v645 = vsel %vm639, %v632, 920167782
    %v646 = vsel %vm638, %v629, %v645
    %v647 = vsel %vm637, %v644, %v646
    %v648 = vsel %vm636, %v626, %v629
    %v649 = vsel %vm639, %v635, 1326507024
    %v650 = vsel %vm638, %v632, %v649
    %v651 = vsel %vm637, %v648, %v650
    %v652 = vshll.u32 %v612, 8
    %v653 = vmul.u32.u64.compose %v652, %v651
    %v654 = vextract.low.u32 %v653
    %v655 = vextract.high.u32 %v653
    %v656 = vmul.u32.u64.compose %v652, %v647
    %v657 = vextract.low.u32 %v656
    %v658 = vextract.high.u32 %v656
    %v659 = vmul.u32 %v652, %v643
    %v660 = vadd.s32 %v655, %v657
    %vm661 = vc.u32 %v655, %v657
    %v662 = vadd.s32 %v658, 1
    %v663 = vsel %vm661, %v662, %v658
    %v664 = vadd.s32 %v659, %v663
    %v665 = vadd.s32 %v664, 536870912
    %v666 = vshrl.u32 %v665, 30
    %v667 = vshll.u32 %v666, 30
    %v668 = vsub.s32 %v664, %v667
    %vm669 = vcmp.lt.s32.totalorder %v668, 0
    %v670 = vsub.s32 0, %v668
    %v671 = vsel %vm669, %v670, %v668
    %v672 = vclz %v671
    %v673 = vsub.s32 %v672, 2
    %vm674 = vcmp.gt.s32.totalorder 0, %v673
    %v675 = vsel %vm674, 0, %v673
    %v676 = vsub.s32 32, %v675
    %v677 = vshll.u32 %v668, %v675
    %v678 = vshrl.u32 %v660, %v676
    %v679 = vor.u32 %v677, %v678
    %v680 = vsub.s32 4294967266, %v675
    %v681 = vadd.s32 %v680, 127
    %v682 = vshll.u32 %v681, 23
    %v683 = vor.u32 4788187, %v682
    %v684 = vand.u32 2147483647, %v683
    %v686 = vcvt.s32.f32 %v679
    %v687 = vmul.f32 %v686, %v684
    %v688 = vxor.u32 %v687, 2147483648
    %v689 = vsel %vm606, %v688, %v687
    %v690 = vsub.s32 4, %v666
    %v691 = vsel %vm606, %v690, %v666
    %v692 = vsel %vm605, %v500, %v689
    %v693 = vsel %vm605, 0, %v691
    %v694 = vcosq.f32.pop %v692
    %v695 = vsinq.f32.pop %v692
    %vm696 = vweird.f32 %v500
    %v697 = vand.u32 %v693, 3
    %vm698 = vcmp.lt.s32.totalorder %v697, 2
    %vm699 = vcmp.eq.s32.totalorder %v697, 0
    %v700 = vxor.u32 %v695, 2147483648
    %v701 = vsel %vm699, %v694, %v700
    %vm702 = vcmp.eq.s32.totalorder %v697, 2
    %v703 = vxor.u32 %v694, 2147483648
    %v704 = vsel %vm702, %v703, %v695
    %v705 = vsel %vm698, %v701, %v704
    %v706 = vsel %vm696, nan, %v705
    %v707 = vand.u32 2147483647, %v499
    %vm708 = vcmp.le.f32.partialorder %v707, 0.7853982
    %vm709 = vcmp.lt.s32.totalorder %v499, 0
    %v710 = vand.u32 %v499, 2139095040
    %v711 = vshrl.u32 %v710, 23
    %v712 = vsub.s32 %v711, 127
    %v713 = vand.u32 2147483647, %v499
    %v714 = vand.u32 %v713, 8388607
    %v715 = vor.u32 %v714, 8388608
    %v716 = vsub.s32 0, %v715
    %v717 = vadd.s32 %v712, 1
    %vm718 = vcmp.gt.s32.totalorder %v717, 0
    %v719 = vsel %vm718, %v717, 0
    %v720 = vshrl.u32 %v719, 5
    %v721 = vand.u32 %v719, 31
    %v722 = vsub.s32 32, %v721
    %v723 = vshrl.u32 683565275, %v722
    %v724 = vshll.u32 683565275, %v721
    %v725 = vshrl.u32 2475754826, %v722
    %v726 = vor.u32 %v724, %v725
    %v727 = vshll.u32 2475754826, %v721
    %v728 = vshrl.u32 2131351028, %v722
    %v729 = vor.u32 %v727, %v728
    %v730 = vshll.u32 2131351028, %v721
    %v731 = vshrl.u32 2102212464, %v722
    %v732 = vor.u32 %v730, %v731
    %v733 = vshll.u32 2102212464, %v721
    %v734 = vshrl.u32 920167782, %v722
    %v735 = vor.u32 %v733, %v734
    %v736 = vshll.u32 920167782, %v721
    %v737 = vshrl.u32 1326507024, %v722
    %v738 = vor.u32 %v736, %v737
    %vm739 = vcmp.lt.s32.totalorder %v720, 1
    %vm740 = vcmp.lt.s32.totalorder %v720, 2
    %vm741 = vcmp.lt.s32.totalorder %v720, 3
    %vm742 = vcmp.lt.s32.totalorder %v720, 4
    %v743 = vsel %vm739, %v723, %v726
    %v744 = vsel %vm742, %v732, 2102212464
    %v745 = vsel %vm741, %v729, %v744
    %v746 = vsel %vm740, %v743, %v745
    %v747 = vsel %vm739, %v726, %v729
    %v748 = vsel %vm742, %v735, 920167782
    %v749 = vsel %vm741, %v732, %v748
    %v750 = vsel %vm740, %v747, %v749
    %v751 = vsel %vm739, %v729, %v732
    %v752 = vsel %vm742, %v738, 1326507024
    %v753 = vsel %vm741, %v735, %v752
    %v754 = vsel %vm740, %v751, %v753
    %v755 = vshll.u32 %v715, 8
    %v756 = vmul.u32.u64.compose %v755, %v754
    %v757 = vextract.low.u32 %v756
    %v758 = vextract.high.u32 %v756
    %v759 = vmul.u32.u64.compose %v755, %v750
    %v760 = vextract.low.u32 %v759
    %v761 = vextract.high.u32 %v759
    %v762 = vmul.u32 %v755, %v746
    %v763 = vadd.s32 %v758, %v760
    %vm764 = vc.u32 %v758, %v760
    %v765 = vadd.s32 %v761, 1
    %v766 = vsel %vm764, %v765, %v761
    %v767 = vadd.s32 %v762, %v766
    %v768 = vadd.s32 %v767, 536870912
    %v769 = vshrl.u32 %v768, 30
    %v770 = vshll.u32 %v769, 30
    %v771 = vsub.s32 %v767, %v770
    %vm772 = vcmp.lt.s32.totalorder %v771, 0
    %v773 = vsub.s32 0, %v771
    %v774 = vsel %vm772, %v773, %v771
    %v775 = vclz %v774
    %v776 = vsub.s32 %v775, 2
    %vm777 = vcmp.gt.s32.totalorder 0, %v776
    %v778 = vsel %vm777, 0, %v776
    %v779 = vsub.s32 32, %v778
    %v780 = vshll.u32 %v771, %v778
    %v781 = vshrl.u32 %v763, %v779
    %v782 = vor.u32 %v780, %v781
    %v783 = vsub.s32 4294967266, %v778
    %v784 = vadd.s32 %v783, 127
    %v785 = vshll.u32 %v784, 23
    %v786 = vor.u32 4788187, %v785
    %v787 = vand.u32 2147483647, %v786
    %v789 = vcvt.s32.f32 %v782
    %v790 = vmul.f32 %v789, %v787
    %v791 = vxor.u32 %v790, 2147483648
    %v792 = vsel %vm709, %v791, %v790
    %v793 = vsub.s32 4, %v769
    %v794 = vsel %vm709, %v793, %v769
    %v795 = vsel %vm708, %v499, %v792
    %v796 = vsel %vm708, 0, %v794
    %v797 = vcosq.f32.pop %v795
    %v798 = vsinq.f32.pop %v795
    %vm799 = vweird.f32 %v499
    %v800 = vadd.s32 %v796, 3
    %v801 = vand.u32 %v800, 3
    %vm802 = vcmp.lt.s32.totalorder %v801, 2
    %vm803 = vcmp.eq.s32.totalorder %v801, 0
    %v804 = vxor.u32 %v798, 2147483648
    %v805 = vsel %vm803, %v797, %v804
    %vm806 = vcmp.eq.s32.totalorder %v801, 2
    %v807 = vxor.u32 %v797, 2147483648
    %v808 = vsel %vm806, %v807, %v798
    %v809 = vsel %vm802, %v805, %v808
    %v810 = vsel %vm799, nan, %v809
    %v811 = vand.u32 2147483647, %v500
    %vm812 = vcmp.le.f32.partialorder %v811, 0.7853982
    %vm813 = vcmp.lt.s32.totalorder %v500, 0
    %v814 = vand.u32 %v500, 2139095040
    %v815 = vshrl.u32 %v814, 23
    %v816 = vsub.s32 %v815, 127
    %v817 = vand.u32 2147483647, %v500
    %v818 = vand.u32 %v817, 8388607
    %v819 = vor.u32 %v818, 8388608
    %v820 = vsub.s32 0, %v819
    %v821 = vadd.s32 %v816, 1
    %vm822 = vcmp.gt.s32.totalorder %v821, 0
    %v823 = vsel %vm822, %v821, 0
    %v824 = vshrl.u32 %v823, 5
    %v825 = vand.u32 %v823, 31
    %v826 = vsub.s32 32, %v825
    %v827 = vshrl.u32 683565275, %v826
    %v828 = vshll.u32 683565275, %v825
    %v829 = vshrl.u32 2475754826, %v826
    %v830 = vor.u32 %v828, %v829
    %v831 = vshll.u32 2475754826, %v825
    %v832 = vshrl.u32 2131351028, %v826
    %v833 = vor.u32 %v831, %v832
    %v834 = vshll.u32 2131351028, %v825
    %v835 = vshrl.u32 2102212464, %v826
    %v836 = vor.u32 %v834, %v835
    %v837 = vshll.u32 2102212464, %v825
    %v838 = vshrl.u32 920167782, %v826
    %v839 = vor.u32 %v837, %v838
    %v840 = vshll.u32 920167782, %v825
    %v841 = vshrl.u32 1326507024, %v826
    %v842 = vor.u32 %v840, %v841
    %vm843 = vcmp.lt.s32.totalorder %v824, 1
    %vm844 = vcmp.lt.s32.totalorder %v824, 2
    %vm845 = vcmp.lt.s32.totalorder %v824, 3
    %vm846 = vcmp.lt.s32.totalorder %v824, 4
    %v847 = vsel %vm843, %v827, %v830
    %v848 = vsel %vm846, %v836, 2102212464
    %v849 = vsel %vm845, %v833, %v848
    %v850 = vsel %vm844, %v847, %v849
    %v851 = vsel %vm843, %v830, %v833
    %v852 = vsel %vm846, %v839, 920167782
    %v853 = vsel %vm845, %v836, %v852
    %v854 = vsel %vm844, %v851, %v853
    %v855 = vsel %vm843, %v833, %v836
    %v856 = vsel %vm846, %v842, 1326507024
    %v857 = vsel %vm845, %v839, %v856
    %v858 = vsel %vm844, %v855, %v857
    %v859 = vshll.u32 %v819, 8
    %v860 = vmul.u32.u64.compose %v859, %v858
    %v861 = vextract.low.u32 %v860
    %v862 = vextract.high.u32 %v860
    %v863 = vmul.u32.u64.compose %v859, %v854
    %v864 = vextract.low.u32 %v863
    %v865 = vextract.high.u32 %v863
    %v866 = vmul.u32 %v859, %v850
    %v867 = vadd.s32 %v862, %v864
    %vm868 = vc.u32 %v862, %v864
    %v869 = vadd.s32 %v865, 1
    %v870 = vsel %vm868, %v869, %v865
    %v871 = vadd.s32 %v866, %v870
    %v872 = vadd.s32 %v871, 536870912
    %v873 = vshrl.u32 %v872, 30
    %v874 = vshll.u32 %v873, 30
    %v875 = vsub.s32 %v871, %v874
    %vm876 = vcmp.lt.s32.totalorder %v875, 0
    %v877 = vsub.s32 0, %v875
    %v878 = vsel %vm876, %v877, %v875
    %v879 = vclz %v878
    %v880 = vsub.s32 %v879, 2
    %vm881 = vcmp.gt.s32.totalorder 0, %v880
    %v882 = vsel %vm881, 0, %v880
    %v883 = vsub.s32 32, %v882
    %v884 = vshll.u32 %v875, %v882
    %v885 = vshrl.u32 %v867, %v883
    %v886 = vor.u32 %v884, %v885
    %v887 = vsub.s32 4294967266, %v882
    %v888 = vadd.s32 %v887, 127
    %v889 = vshll.u32 %v888, 23
    %v890 = vor.u32 4788187, %v889
    %v891 = vand.u32 2147483647, %v890
    %v893 = vcvt.s32.f32 %v886
    %v894 = vmul.f32 %v893, %v891
    %v895 = vxor.u32 %v894, 2147483648
    %v896 = vsel %vm813, %v895, %v894
    %v897 = vsub.s32 4, %v873
    %v898 = vsel %vm813, %v897, %v873
    %v899 = vsel %vm812, %v500, %v896
    %v900 = vsel %vm812, 0, %v898
    %v901 = vcosq.f32.pop %v899
    %v902 = vsinq.f32.pop %v899
    %vm903 = vweird.f32 %v500
    %v904 = vadd.s32 %v900, 3
    %v905 = vand.u32 %v904, 3
    %vm906 = vcmp.lt.s32.totalorder %v905, 2
    %vm907 = vcmp.eq.s32.totalorder %v905, 0
    %v908 = vxor.u32 %v902, 2147483648
    %v909 = vsel %vm907, %v901, %v908
    %vm910 = vcmp.eq.s32.totalorder %v905, 2
    %v911 = vxor.u32 %v901, 2147483648
    %v912 = vsel %vm910, %v911, %v902
    %v913 = vsel %vm906, %v909, %v912
    %v914 = vsel %vm903, nan, %v913
    %v915 = vlaneseq
    %v916 = vshrl.u32 %v915, 7
    %v917 = vcvt.s32.f32 %v916
    %v918 = vand.u32 %v916, 1
    %vm919 = vcmp.ne.s32.totalorder %v918, 0
    %v920 = vsel %vm919, 1.0, -1.0
    %v921 = vsel %vm919, 1.0, 0.0
    %v922 = vand.u32 %v916, 2
    %vm923 = vcmp.ne.s32.totalorder %v922, 0
    %v924 = vsel %vm923, 1.0, -1.0
    %v925 = vsel %vm923, 1.0, 0.0
    %v926 = vand.u32 %v916, 4
    %vm927 = vcmp.ne.s32.totalorder %v926, 0
    %v928 = vsel %vm927, 1.0, -1.0
    %v929 = vsel %vm927, 1.0, 0.0
    %v930 = vrot.slane %v917, 7
    %v931 = vxor.u32 %v916, 1
    %v932 = vcvt.s32.f32 %v931
    %vm933 = vcmp.eq.f32.partialorder %v930, %v932
    %v934 = vrot.slane %v917, 6
    %v935 = vxor.u32 %v916, 2
    %v936 = vcvt.s32.f32 %v935
    %vm937 = vcmp.eq.f32.partialorder %v934, %v936
    %v938 = vsub.f32 %v810, %v603
    %v939 = vlaneseq
    %v940 = vshrl.u32 %v939, 7
    %v941 = vsub.s32 1, %v940
    %v942 = vrot.slane %v938, %v941
    %v943 = vmul.f32 %v929, %v942
    %v944 = vlaneseq
    %v945 = vshrl.u32 %v944, 7
    %v946 = vsub.s32 1, %v945
    %v947 = vrot.slane %v603, %v946
    %v948 = vadd.f32 %v947, %v943
    %v949 = vlaneseq
    %v950 = vshrl.u32 %v949, 7
    %v951 = vsub.s32 2, %v950
    %v952 = vrot.slane %v938, %v951
    %v953 = vmul.f32 %v925, %v952
    %v954 = vlaneseq
    %v955 = vshrl.u32 %v954, 7
    %v956 = vsub.s32 2, %v955
    %v957 = vrot.slane %v603, %v956
    %v958 = vadd.f32 %v957, %v953
    %v959 = vmul.f32 %v948, %v958
    %v960 = vlaneseq
    %v961 = vshrl.u32 %v960, 7
    %v962 = vsub.s32 3, %v961
    %v963 = vrot.slane %v938, %v962
    %v964 = vmul.f32 %v921, %v963
    %v965 = vlaneseq
    %v966 = vshrl.u32 %v965, 7
    %v967 = vsub.s32 3, %v966
    %v968 = vrot.slane %v603, %v967
    %v969 = vadd.f32 %v968, %v964
    %v970 = vmul.f32 %v959, %v969
    %v971 = vlaneseq
    %v972 = vshrl.u32 %v971, 7
    %v973 = vsub.s32 0, %v972
    %v974 = vrot.slane %v603, %v973
    %v975 = vmul.f32 %v974, %v970
    %v976 = vlaneseq
    %v977 = vshrl.u32 %v976, 7
    %v978 = vsub.s32 0, %v977
    %v979 = vrot.slane %v810, %v978
    %v980 = vmul.f32 %v979, %v970
    %v981 = vlaneseq
    %v982 = vshrl.u32 %v981, 7
    %v983 = vsub.s32 4, %v982
    %v984 = vrot.slane %v603, %v983
    %v985 = vmul.f32 %v984, %v975
    %v986 = vlaneseq
    %v987 = vshrl.u32 %v986, 7
    %v988 = vsub.s32 4, %v987
    %v989 = vrot.slane %v810, %v988
    %v990 = vmul.f32 %v989, 0.0
    %v991 = vadd.f32 %v985, %v990
    %v992 = vmul.f32 %v984, 0.0
    %v993 = vmul.f32 %v989, %v975
    %v994 = vsub.f32 %v992, %v993
    %v995 = vmul.f32 %v984, %v980
    %v996 = vsub.f32 %v995, %v990
    %v997 = vmul.f32 %v989, %v980
    %v998 = vadd.f32 %v992, %v997
    %v999 = vlaneseq
    %v1000 = vshrl.u32 %v999, 7
    %v1001 = vsub.s32 5, %v1000
    %v1002 = vrot.slane %v810, %v1001
    %v1003 = vmul.f32 %v928, %v1002
    %v1004 = vlaneseq
    %v1005 = vshrl.u32 %v1004, 7
    %v1006 = vsub.s32 5, %v1005
    %v1007 = vrot.slane %v603, %v1006
    %v1008 = vmul.f32 %v1007, %v991
    %v1009 = vmul.f32 %v1003, %v994
    %v1010 = vsub.f32 %v1008, %v1009
    %v1011 = vmul.f32 %v1007, %v994
    %v1012 = vmul.f32 %v1003, %v991
    %v1013 = vadd.f32 %v1011, %v1012
    %v1014 = vmul.f32 %v1007, %v996
    %v1015 = vmul.f32 %v1003, %v998
    %v1016 = vsub.f32 %v1014, %v1015
    %v1017 = vmul.f32 %v1007, %v998
    %v1018 = vmul.f32 %v1003, %v996
    %v1019 = vadd.f32 %v1017, %v1018
    %v1020 = vlaneseq
    %v1021 = vshrl.u32 %v1020, 7
    %v1022 = vsub.s32 6, %v1021
    %v1023 = vrot.slane %v810, %v1022
    %v1024 = vmul.f32 %v924, %v1023
    %v1025 = vlaneseq
    %v1026 = vshrl.u32 %v1025, 7
    %v1027 = vsub.s32 6, %v1026
    %v1028 = vrot.slane %v603, %v1027
    %v1029 = vmul.f32 %v1028, %v1010
    %v1030 = vmul.f32 %v1024, %v1013
    %v1031 = vsub.f32 %v1029, %v1030
    %v1032 = vmul.f32 %v1028, %v1013
    %v1033 = vmul.f32 %v1024, %v1010
    %v1034 = vadd.f32 %v1032, %v1033
    %v1035 = vmul.f32 %v1028, %v1016
    %v1036 = vmul.f32 %v1024, %v1019
    %v1037 = vsub.f32 %v1035, %v1036
    %v1038 = vmul.f32 %v1028, %v1019
    %v1039 = vmul.f32 %v1024, %v1016
    %v1040 = vadd.f32 %v1038, %v1039
    %v1041 = vlaneseq
    %v1042 = vshrl.u32 %v1041, 7
    %v1043 = vsub.s32 7, %v1042
    %v1044 = vrot.slane %v810, %v1043
    %v1045 = vmul.f32 %v920, %v1044
    %v1046 = vlaneseq
    %v1047 = vshrl.u32 %v1046, 7
    %v1048 = vsub.s32 7, %v1047
    %v1049 = vrot.slane %v603, %v1048
    %v1050 = vmul.f32 %v1049, %v1031
    %v1051 = vmul.f32 %v1045, %v1034
    %v1052 = vsub.f32 %v1050, %v1051
    %v1053 = vmul.f32 %v1049, %v1034
    %v1054 = vmul.f32 %v1045, %v1031
    %v1055 = vadd.f32 %v1053, %v1054
    %v1056 = vmul.f32 %v1049, %v1037
    %v1057 = vmul.f32 %v1045, %v1040
    %v1058 = vsub.f32 %v1056, %v1057
    %v1059 = vmul.f32 %v1049, %v1040
    %v1060 = vmul.f32 %v1045, %v1037
    %v1061 = vadd.f32 %v1059, %v1060
    %v1062 = vlaneseq
    %v1063 = vshrl.u32 %v1062, 7
    %v1064 = vsub.s32 0, %v1063
    %v1065 = vrot.slane %v706, %v1064
    %v1066 = vmul.f32 %v1065, %v1052
    %v1067 = vlaneseq
    %v1068 = vshrl.u32 %v1067, 7
    %v1069 = vsub.s32 0, %v1068
    %v1070 = vrot.slane %v914, %v1069
    %v1071 = vmul.f32 %v1070, %v1061
    %v1072 = vadd.f32 %v1066, %v1071
    %v1073 = vmul.f32 %v1065, %v1055
    %v1074 = vmul.f32 %v1070, %v1058
    %v1075 = vsub.f32 %v1073, %v1074
    %v1076 = vmul.f32 %v1065, %v1058
    %v1077 = vmul.f32 %v1070, %v1055
    %v1078 = vadd.f32 %v1076, %v1077
    %v1079 = vmul.f32 %v1065, %v1061
    %v1080 = vmul.f32 %v1070, %v1052
    %v1081 = vsub.f32 %v1079, %v1080
    %v1082 = vlaneseq
    %v1083 = vshrl.u32 %v1082, 7
    %v1084 = vsub.s32 1, %v1083
    %v1085 = vrot.slane %v706, %v1084
    %v1086 = vmul.f32 %v1085, %v1072
    %v1087 = vrot.slane %v1075, 4
    %v1088 = vlaneseq
    %v1089 = vshrl.u32 %v1088, 7
    %v1090 = vsub.s32 1, %v1089
    %v1091 = vrot.slane %v914, %v1090
    %v1092 = vmul.f32 %v1091, %v1087
    %v1093 = vadd.f32 %v1086, %v1092
    %v1094 = vmul.f32 %v1085, %v1075
    %v1095 = vrot.slane %v1072, 4
    %v1096 = vmul.f32 %v1091, %v1095
    %v1097 = vsub.f32 %v1094, %v1096
    %v1098 = vmul.f32 %v1085, %v1078
    %v1099 = vrot.slane %v1081, 4
    %v1100 = vmul.f32 %v1091, %v1099
    %v1101 = vadd.f32 %v1098, %v1100
    %v1102 = vmul.f32 %v1085, %v1081
    %v1103 = vrot.slane %v1078, 4
    %v1104 = vmul.f32 %v1091, %v1103
    %v1105 = vsub.f32 %v1102, %v1104
    %v1106 = vlaneseq
    %v1107 = vshrl.u32 %v1106, 7
    %v1108 = vsub.s32 2, %v1107
    %v1109 = vrot.slane %v706, %v1108
    %v1110 = vmul.f32 %v1109, %v1093
    %v1111 = vrot.slane %v1097, 6
    %v1112 = vrot.slane %v1097, 2
    %v1113 = vsel %vm937, 1, 0
    %1114 = vset.pattern.permute.xlu0 0
    %1115 = vperm.xlu0 %1114, %v1113
    %v1116 = vpop.permute.xlu0 %1115
    %vm1117 = vcmp.eq.s32.totalorder %v1116, 1
    %v1118 = vsel %vm1117, %v1111, %v1112
    %v1119 = vlaneseq
    %v1120 = vshrl.u32 %v1119, 7
    %v1121 = vsub.s32 2, %v1120
    %v1122 = vrot.slane %v914, %v1121
    %v1123 = vmul.f32 %v1122, %v1118
    %v1124 = vadd.f32 %v1110, %v1123
    %v1125 = vmul.f32 %v1109, %v1097
    %v1126 = vrot.slane %v1093, 6
    %v1127 = vrot.slane %v1093, 2
    %v1128 = vsel %vm1117, %v1126, %v1127
    %v1129 = vmul.f32 %v1122, %v1128
    %v1130 = vsub.f32 %v1125, %v1129
    %v1131 = vmul.f32 %v1109, %v1101
    %v1132 = vrot.slane %v1105, 6
    %v1133 = vrot.slane %v1105, 2
    %v1134 = vsel %vm1117, %v1132, %v1133
    %v1135 = vmul.f32 %v1122, %v1134
    %v1136 = vadd.f32 %v1131, %v1135
    %v1137 = vmul.f32 %v1109, %v1105
    %v1138 = vrot.slane %v1101, 6
    %v1139 = vrot.slane %v1101, 2
    %v1140 = vsel %vm1117, %v1138, %v1139
    %v1141 = vmul.f32 %v1122, %v1140
    %v1142 = vsub.f32 %v1137, %v1141
    %v1143 = vlaneseq
    %v1144 = vshrl.u32 %v1143, 7
    %v1145 = vsub.s32 3, %v1144
    %v1146 = vrot.slane %v706, %v1145
    %v1147 = vmul.f32 %v1146, %v1124
    %v1148 = vrot.slane %v1130, 7
    %v1149 = vrot.slane %v1130, 1
    %v1150 = vsel %vm933, 1, 0
    %1151 = vset.pattern.permute.xlu0 0
    %1152 = vperm.xlu0 %1151, %v1150
    %v1153 = vpop.permute.xlu0 %1152
    %vm1154 = vcmp.eq.s32.totalorder %v1153, 1
    %v1155 = vsel %vm1154, %v1148, %v1149
    %v1156 = vlaneseq
    %v1157 = vshrl.u32 %v1156, 7
    %v1158 = vsub.s32 3, %v1157
    %v1159 = vrot.slane %v914, %v1158
    %v1160 = vmul.f32 %v1159, %v1155
    %v1161 = vadd.f32 %v1147, %v1160
    %v1162 = vmul.f32 %v1146, %v1130
    %v1163 = vrot.slane %v1124, 7
    %v1164 = vrot.slane %v1124, 1
    %v1165 = vsel %vm1154, %v1163, %v1164
    %v1166 = vmul.f32 %v1159, %v1165
    %v1167 = vsub.f32 %v1162, %v1166
    %v1168 = vmul.f32 %v1146, %v1136
    %v1169 = vrot.slane %v1142, 7
    %v1170 = vrot.slane %v1142, 1
    %v1171 = vsel %vm1154, %v1169, %v1170
    %v1172 = vmul.f32 %v1159, %v1171
    %v1173 = vadd.f32 %v1168, %v1172
    %v1174 = vmul.f32 %v1146, %v1142
    %v1175 = vrot.slane %v1136, 7
    %v1176 = vrot.slane %v1136, 1
    %v1177 = vsel %vm1154, %v1175, %v1176
    %v1178 = vmul.f32 %v1159, %v1177
    %v1179 = vsub.f32 %v1174, %v1178
    %v1180 = vlaneseq
    %v1181 = vshrl.u32 %v1180, 7
    %v1182 = vsub.s32 4, %v1181
    %v1183 = vrot.slane %v706, %v1182
    %v1184 = vmul.f32 %v1183, %v1161
    %v1185 = vlaneseq
    %v1186 = vshrl.u32 %v1185, 7
    %v1187 = vsub.s32 4, %v1186
    %v1188 = vrot.slane %v914, %v1187
    %v1189 = vmul.f32 %v1188, %v1173
    %v1190 = vsub.f32 %v1184, %v1189
    %v1191 = vmul.f32 %v1183, %v1167
    %v1192 = vmul.f32 %v1188, %v1179
    %v1193 = vsub.f32 %v1191, %v1192
    %v1194 = vmul.f32 %v1188, %v1161
    %v1195 = vmul.f32 %v1183, %v1173
    %v1196 = vadd.f32 %v1194, %v1195
    %v1197 = vmul.f32 %v1188, %v1167
    %v1198 = vmul.f32 %v1183, %v1179
    %v1199 = vadd.f32 %v1197, %v1198
    %v1200 = vlaneseq
    %v1201 = vshrl.u32 %v1200, 7
    %v1202 = vsub.s32 5, %v1201
    %v1203 = vrot.slane %v914, %v1202
    %v1204 = vmul.f32 %v928, %v1203
    %v1205 = vlaneseq
    %v1206 = vshrl.u32 %v1205, 7
    %v1207 = vsub.s32 5, %v1206
    %v1208 = vrot.slane %v706, %v1207
    %v1209 = vmul.f32 %v1208, %v1190
    %v1210 = vrot.slane %v1190, 4
    %v1211 = vmul.f32 %v1204, %v1210
    %v1212 = vadd.f32 %v1209, %v1211
    %v1213 = vmul.f32 %v1208, %v1193
    %v1214 = vrot.slane %v1193, 4
    %v1215 = vmul.f32 %v1204, %v1214
    %v1216 = vadd.f32 %v1213, %v1215
    %v1217 = vmul.f32 %v1208, %v1196
    %v1218 = vrot.slane %v1196, 4
    %v1219 = vmul.f32 %v1204, %v1218
    %v1220 = vadd.f32 %v1217, %v1219
    %v1221 = vmul.f32 %v1208, %v1199
    %v1222 = vrot.slane %v1199, 4
    %v1223 = vmul.f32 %v1204, %v1222
    %v1224 = vadd.f32 %v1221, %v1223
    %v1225 = vlaneseq
    %v1226 = vshrl.u32 %v1225, 7
    %v1227 = vsub.s32 6, %v1226
    %v1228 = vrot.slane %v914, %v1227
    %v1229 = vmul.f32 %v924, %v1228
    %v1230 = vlaneseq
    %v1231 = vshrl.u32 %v1230, 7
    %v1232 = vsub.s32 6, %v1231
    %v1233 = vrot.slane %v706, %v1232
    %v1234 = vmul.f32 %v1233, %v1212
    %v1235 = vrot.slane %v1212, 6
    %v1236 = vrot.slane %v1212, 2
    %v1237 = vsel %vm1117, %v1235, %v1236
    %v1238 = vmul.f32 %v1229, %v1237
    %v1239 = vadd.f32 %v1234, %v1238
    %v1240 = vmul.f32 %v1233, %v1216
    %v1241 = vrot.slane %v1216, 6
    %v1242 = vrot.slane %v1216, 2
    %v1243 = vsel %vm1117, %v1241, %v1242
    %v1244 = vmul.f32 %v1229, %v1243
    %v1245 = vadd.f32 %v1240, %v1244
    %v1246 = vmul.f32 %v1233, %v1220
    %v1247 = vrot.slane %v1220, 6
    %v1248 = vrot.slane %v1220, 2
    %v1249 = vsel %vm1117, %v1247, %v1248
    %v1250 = vmul.f32 %v1229, %v1249
    %v1251 = vadd.f32 %v1246, %v1250
    %v1252 = vmul.f32 %v1233, %v1224
    %v1253 = vrot.slane %v1224, 6
    %v1254 = vrot.slane %v1224, 2
    %v1255 = vsel %vm1117, %v1253, %v1254
    %v1256 = vmul.f32 %v1229, %v1255
    %v1257 = vadd.f32 %v1252, %v1256
    %v1258 = vlaneseq
    %v1259 = vshrl.u32 %v1258, 7
    %v1260 = vsub.s32 7, %v1259
    %v1261 = vrot.slane %v914, %v1260
    %v1262 = vmul.f32 %v920, %v1261
    %v1263 = vlaneseq
    %v1264 = vshrl.u32 %v1263, 7
    %v1265 = vsub.s32 7, %v1264
    %v1266 = vrot.slane %v706, %v1265
    %v1267 = vmul.f32 %v1266, %v1239
    %v1268 = vrot.slane %v1239, 7
    %v1269 = vrot.slane %v1239, 1
    %v1270 = vsel %vm1154, %v1268, %v1269
    %v1271 = vmul.f32 %v1262, %v1270
    %v1272 = vadd.f32 %v1267, %v1271
    %v1273 = vmul.f32 %v1266, %v1245
    %v1274 = vrot.slane %v1245, 7
    %v1275 = vrot.slane %v1245, 1
    %v1276 = vsel %vm1154, %v1274, %v1275
    %v1277 = vmul.f32 %v1262, %v1276
    %v1278 = vadd.f32 %v1273, %v1277
    %v1279 = vmul.f32 %v1266, %v1251
    %v1280 = vrot.slane %v1251, 7
    %v1281 = vrot.slane %v1251, 1
    %v1282 = vsel %vm1154, %v1280, %v1281
    %v1283 = vmul.f32 %v1262, %v1282
    %v1284 = vadd.f32 %v1279, %v1283
    %v1285 = vmul.f32 %v1266, %v1257
    %v1286 = vrot.slane %v1257, 7
    %v1287 = vrot.slane %v1257, 1
    %v1288 = vsel %vm1154, %v1286, %v1287
    %v1289 = vmul.f32 %v1262, %v1288
    %v1290 = vadd.f32 %v1285, %v1289
    %v1291 = vld [vmem:[%s1] sm:$0xff]
    %v1292 = vld [vmem:[%s1 + $0x8] sm:$0xff]
    %v1293 = vld [vmem:[%s1 + $0x10] sm:$0xff]
    %v1294 = vld [vmem:[%s1 + $0x18] sm:$0xff]
    %vm1295 = vcmask 261120
    %v1297 = vsel %vm1295, %v1291, 0
    %v1300 = vsel %vm1295, %v1292, 0
    %v1303 = vsel %vm1295, %v1293, 0
    %v1306 = vsel %vm1295, %v1294, 0
    %1308 = vmatprep.subr.mxu0 0.0
    %1309 = vmatpush1.msra.mxu0 %v1272
    %1310 = vmatprep.subr.mxu0 0.0
    %1311 = vmatpush1.msra.mxu0 %v1284
    %1312 = vmatprep.subr.mxu0 0.0
    %1313 = vmatpush1.msra.mxu0 %v1278
    %1314 = vmatprep.subr.mxu0 0.0
    %1315 = vmatpush1.msra.mxu0 %v1290
    %1316 = vmatprep.subr.mxu0 0.0
    %1317 = vmatpush1.msra.mxu0 0.0
    %1318 = vmatprep.subr.mxu0 0.0
    %1319 = vmatpush1.msra.mxu0 0.0
    %1320 = vmatprep.subr.mxu0 0.0
    %1321 = vmatpush1.msra.mxu0 0.0
    %1322 = vmatprep.subr.mxu0 0.0
    %1323 = vmatpush1.msra.mxu0 0.0
    %1324 = vmatprep.subr.mxu0 0.0
    %1325 = vmatpush1.msra.mxu0 0.0
    %1326 = vmatprep.subr.mxu0 0.0
    %1327 = vmatpush1.msra.mxu0 0.0
    %1328 = vmatprep.subr.mxu0 0.0
    %1329 = vmatpush1.msra.mxu0 0.0
    %1330 = vmatprep.subr.mxu0 0.0
    %1331 = vmatpush1.msra.mxu0 0.0
    %1332 = vmatprep.subr.mxu0 0.0
    %1333 = vmatpush1.msra.mxu0 0.0
    %1334 = vmatprep.subr.mxu0 0.0
    %1335 = vmatpush1.msra.mxu0 0.0
    %1336 = vmatprep.subr.mxu0 0.0
    %1337 = vmatpush1.msra.mxu0 0.0
    %1338 = vmatprep.subr.mxu0 0.0
    %1339 = vmatpush1.msra.mxu0 0.0
    %1340 = vmatprep.subr.mxu0 0.0
    %1341 = vmatpush1.msra.mxu0 0.0
    %1342 = vmatprep.subr.mxu0 0.0
    %1343 = vmatpush1.msra.mxu0 0.0
    %1344 = vmatprep.subr.mxu0 0.0
    %1345 = vmatpush1.msra.mxu0 0.0
    %1346 = vmatprep.subr.mxu0 0.0
    %1347 = vmatpush1.msra.mxu0 0.0
    %1348 = vmatprep.subr.mxu0 0.0
    %1349 = vmatpush1.msra.mxu0 0.0
    %1350 = vmatprep.subr.mxu0 0.0
    %1351 = vmatpush1.msra.mxu0 0.0
    %1352 = vmatprep.subr.mxu0 0.0
    %1353 = vmatpush1.msra.mxu0 0.0
    %1354 = vmatprep.subr.mxu0 0.0
    %1355 = vmatpush1.msra.mxu0 0.0
    %1356 = vmatprep.subr.mxu0 0.0
    %1357 = vmatpush1.msra.mxu0 0.0
    %1358 = vmatprep.subr.mxu0 0.0
    %1359 = vmatpush1.msra.mxu0 0.0
    %1360 = vmatprep.subr.mxu0 0.0
    %1361 = vmatpush1.msra.mxu0 0.0
    %1362 = vmatprep.subr.mxu0 0.0
    %1363 = vmatpush1.msra.mxu0 0.0
    %1364 = vmatprep.subr.mxu0 0.0
    %1365 = vmatpush1.msra.mxu0 0.0
    %1366 = vmatprep.subr.mxu0 0.0
    %1367 = vmatpush1.msra.mxu0 0.0
    %1368 = vmatprep.subr.mxu0 0.0
    %1369 = vmatpush1.msra.mxu0 0.0
    %1370 = vmatprep.subr.mxu0 0.0
    %1371 = vmatpush1.msra.mxu0 0.0
    %1372 = vmatprep.mubr.f32.mxu0 0.0
    %1373 = vmatmul.mubr.f32.gmra.mrb[0].mxu0 %v1297
    %v1374 = vpop.f32.mrb[0].mxu0
    %v1375 = vadd.f32 0.0, %v1374
    %v1376 = vpop.f32.mrb[0].mxu0
    %1377 = vmatprep.mubr.f32.mxu0 0.0
    %1378 = vmatmul.mubr.f32.gmra.mrb[0].mxu0 %v1300
    %v1379 = vpop.f32.mrb[0].mxu0
    %v1380 = vadd.f32 0.0, %v1379
    %v1381 = vpop.f32.mrb[0].mxu0
    %1382 = vmatprep.mubr.f32.mxu0 0.0
    %1383 = vmatmul.mubr.f32.gmra.mrb[0].mxu0 %v1303
    %v1384 = vpop.f32.mrb[0].mxu0
    %v1385 = vadd.f32 0.0, %v1384
    %v1386 = vpop.f32.mrb[0].mxu0
    %1387 = vmatprep.mubr.f32.mxu0 0.0
    %1388 = vmatmul.mubr.f32.gmra.mrb[0].mxu0 %v1306
    %v1389 = vpop.f32.mrb[0].mxu0
    %v1390 = vadd.f32 0.0, %v1389
    %v1391 = vpop.f32.mrb[0].mxu0
    %1392 = vdwg.mxu0
    %v1393 = vmul.f32 %v1375, %v1375
    %v1394 = vmul.f32 %v1380, %v1380
    %v1395 = vmul.f32 %v1385, %v1385
    %v1396 = vmul.f32 %v1390, %v1390
    %v1397 = vadd.f32 %v1393, %v1395
    %v1398 = vadd.f32 %v1394, %v1396
    %v1399 = vld [vmem:[%s2] sm:$0xf]
    %v1401 = vsel %vm144, %v1399, 0
    %1403 = vmatprep.subr.mxu0 0.0
    %1404 = vmatpush1.msra.mxu0 %v1397
    %1405 = vmatprep.subr.mxu0 0.0
    %1406 = vmatpush1.msra.mxu0 %v1398
    %1407 = vmatprep.subr.mxu0 0.0
    %1408 = vmatpush1.msra.mxu0 0.0
    %1409 = vmatprep.subr.mxu0 0.0
    %1410 = vmatpush1.msra.mxu0 0.0
    %1411 = vmatprep.subr.mxu0 0.0
    %1412 = vmatpush1.msra.mxu0 0.0
    %1413 = vmatprep.subr.mxu0 0.0
    %1414 = vmatpush1.msra.mxu0 0.0
    %1415 = vmatprep.subr.mxu0 0.0
    %1416 = vmatpush1.msra.mxu0 0.0
    %1417 = vmatprep.subr.mxu0 0.0
    %1418 = vmatpush1.msra.mxu0 0.0
    %1419 = vmatprep.subr.mxu0 0.0
    %1420 = vmatpush1.msra.mxu0 0.0
    %1421 = vmatprep.subr.mxu0 0.0
    %1422 = vmatpush1.msra.mxu0 0.0
    %1423 = vmatprep.subr.mxu0 0.0
    %1424 = vmatpush1.msra.mxu0 0.0
    %1425 = vmatprep.subr.mxu0 0.0
    %1426 = vmatpush1.msra.mxu0 0.0
    %1427 = vmatprep.subr.mxu0 0.0
    %1428 = vmatpush1.msra.mxu0 0.0
    %1429 = vmatprep.subr.mxu0 0.0
    %1430 = vmatpush1.msra.mxu0 0.0
    %1431 = vmatprep.subr.mxu0 0.0
    %1432 = vmatpush1.msra.mxu0 0.0
    %1433 = vmatprep.subr.mxu0 0.0
    %1434 = vmatpush1.msra.mxu0 0.0
    %1435 = vmatprep.subr.mxu0 0.0
    %1436 = vmatpush1.msra.mxu0 0.0
    %1437 = vmatprep.subr.mxu0 0.0
    %1438 = vmatpush1.msra.mxu0 0.0
    %1439 = vmatprep.subr.mxu0 0.0
    %1440 = vmatpush1.msra.mxu0 0.0
    %1441 = vmatprep.subr.mxu0 0.0
    %1442 = vmatpush1.msra.mxu0 0.0
    %1443 = vmatprep.subr.mxu0 0.0
    %1444 = vmatpush1.msra.mxu0 0.0
    %1445 = vmatprep.subr.mxu0 0.0
    %1446 = vmatpush1.msra.mxu0 0.0
    %1447 = vmatprep.subr.mxu0 0.0
    %1448 = vmatpush1.msra.mxu0 0.0
    %1449 = vmatprep.subr.mxu0 0.0
    %1450 = vmatpush1.msra.mxu0 0.0
    %1451 = vmatprep.subr.mxu0 0.0
    %1452 = vmatpush1.msra.mxu0 0.0
    %1453 = vmatprep.subr.mxu0 0.0
    %1454 = vmatpush1.msra.mxu0 0.0
    %1455 = vmatprep.subr.mxu0 0.0
    %1456 = vmatpush1.msra.mxu0 0.0
    %1457 = vmatprep.subr.mxu0 0.0
    %1458 = vmatpush1.msra.mxu0 0.0
    %1459 = vmatprep.subr.mxu0 0.0
    %1460 = vmatpush1.msra.mxu0 0.0
    %1461 = vmatprep.subr.mxu0 0.0
    %1462 = vmatpush1.msra.mxu0 0.0
    %1463 = vmatprep.subr.mxu0 0.0
    %1464 = vmatpush1.msra.mxu0 0.0
    %1465 = vmatprep.subr.mxu0 0.0
    %1466 = vmatpush1.msra.mxu0 0.0
    %1467 = vmatprep.mubr.f32.mxu0 0.0
    %1468 = vmatmul.mubr.f32.gmra.mrb[0].mxu0 %v1401
    %v1469 = vpop.f32.mrb[0].mxu0
    %v1470 = vadd.f32 0.0, %v1469
    %v1471 = vpop.f32.mrb[0].mxu0
    %1472 = vdwg.mxu0
    %v1474 = vrot.slane %v1470, 1
    %v1476 = vmax.f32 %v1470, %v1474
    %v1478 = vrot.slane %v1476, 2
    %v1480 = vmax.f32 %v1476, %v1478
    %v1481 = vsub.f32 %v1470, %v1480
    %v1482 = vmul.f32 %v1481, 1.442695
    %v1483 = vpow.pop %v1482
    %v1485 = vrot.slane %v1480, 7
    %v1487 = vsub.f32 %v1470, %v1485
    %v1488 = vmul.f32 %v1487, 1.442695
    %v1489 = vpow.pop %v1488
    %v1491 = vrot.slane %v1489, 1
    %v1493 = vadd.f32 %v1483, %v1491
    %v1494 = vrot.slane %v1480, 6
    %v1496 = vsub.f32 %v1470, %v1494
    %v1497 = vmul.f32 %v1496, 1.442695
    %v1498 = vpow.pop %v1497
    %v1500 = vrot.slane %v1498, 2
    %v1502 = vadd.f32 %v1493, %v1500
    %v1503 = vrot.slane %v1480, 5
    %v1505 = vsub.f32 %v1470, %v1503
    %v1506 = vmul.f32 %v1505, 1.442695
    %v1507 = vpow.pop %v1506
    %v1509 = vrot.slane %v1507, 3
    %v1511 = vadd.f32 %v1502, %v1509
    %v1512 = vlog2.pop %v1511
    %v1513 = vmul.f32 %v1512, 0.6931472
    %v1514 = vadd.f32 %v1480, %v1513
    %v1515 = vlaneseq
    %v1516 = vshrl.u32 %v1515, 7
    %v1517 = vsub.s32 0, %v1516
    %v1518 = vrot.slane %v1514, %v1517
    %v1519 = vsub.f32 %v1470, %v1518
    %1520 = vst [vmem:[#allocation2] sm:$0xf] %v1519
    // Predicated region
    $region18: #{tpu_custom_call.1} parent=1 // pred_check
      _
    $region19: #{tpu_custom_call.1} parent=1 // pred_check_branch
      %1522 = sbr.rel (0) target = $region21
    $region20: #{tpu_custom_call.1} parent=1 // pred_region
      %s1524 = ssub.s32 64, 64
      %1525 = vsyncadd [#allocation3], %s1524
      %s1527 = sshll.u32 [#allocation2], 4
      %s1528 = int_to_ptr.vmem [resolvable:$true] %s1527
      %1530 = dma.vmem_to_hbm [thread:$0]  %s1528, 64, %s4, [#allocation3]
    $region21: #{tpu_custom_call.1} parent=1 // pred_fallthru
      _
    // Predicated region
    $region22: #{tpu_custom_call.1} parent=1 // pred_check
      _
    $region23: #{tpu_custom_call.1} parent=1 // pred_check_branch
      %1532 = sbr.rel (0) target = $region25
    $region24: #{tpu_custom_call.1} parent=1 // pred_region
      %1533 = dma.done [#allocation3], 64
    $region25: #{tpu_custom_call.1} parent=1 // pred_fallthru
      _
    %1534 = vsyncpa [#allocation3], 1

</llo_original>
